<compile_context>
chip_gen: v5e
topology: v5e:2x2
jax: 0.10.0
libtpu: 0.0.40
codegen_flags: <defaults>
</compile_context>

<pallas_src>
import math

import jax
import jax.numpy as jnp
from jax.experimental import pallas as pl
from jax.experimental.pallas import tpu as pltpu

BN_EPS = 1e-5


# ---------------------------------------------------------------------------
# tiling helpers
# ---------------------------------------------------------------------------
def _vmem_bytes():
    try:
        return int(pltpu.get_tpu_info().vmem_capacity_bytes)
    except Exception:
        return 64 * 1024 * 1024  # conservative (v7x per-TC VMEM)


def _pick_row_tile(m, target=2048):
    """Row tile for the 1x1 kernels: large (amortize the ~0.35us/step overhead),
    sublane aligned, and >= 2 grid steps when possible (v7x megacore balance)."""
    if m <= 32:
        return m
    half = -(-m // 2)                 # ceil(m/2) -> at least two grid steps
    t = min(target, half)
    t = max(16, (t // 16) * 16)       # bf16 sublane-pack friendly
    return min(t, m)


def _pick_h_tile(h, cap):
    """Largest divisor of h that is <= cap (keeps halo logic exact)."""
    cap = max(1, min(int(cap), h))
    t = cap
    while h % t:
        t -= 1
    return t


def _auto_h_tile(n_imgs, h, w, c):
    """Generation-aware row-tile budget for the fused bottleneck kernel."""
    target = min(max(_vmem_bytes() // 32, 1 << 20), 4 << 20)   # ~1-4 MiB / step
    th = max(1, target // max(1, w * c * 64))                  # ~64 B per (w*c) per row
    if n_imgs == 1:
        th = min(th, max(1, h // 2))   # keep >= 2 grid steps for megacore
    return th


# ---------------------------------------------------------------------------
# cv1: 1x1 conv + folded-BN bias + SiLU, pre-split weights -> two lane-dense outputs
# ---------------------------------------------------------------------------
def _cv1_kernel(x_ref, wa_ref, wb_ref, ba_ref, bb_ref, oa_ref, ob_ref):
    x = x_ref[...]
    ya = jnp.dot(x, wa_ref[...], preferred_element_type=jnp.float32) + ba_ref[...]
    yb = jnp.dot(x, wb_ref[...], preferred_element_type=jnp.float32) + bb_ref[...]
    oa_ref[...] = (ya * jax.nn.sigmoid(ya)).astype(oa_ref.dtype)   # SiLU
    ob_ref[...] = (yb * jax.nn.sigmoid(yb)).astype(ob_ref.dtype)


def conv1x1_split(x2d, wa, wb, ba, bb, row_tile=2048):
    M, cin = x2d.shape
    c = wa.shape[1]
    tm = _pick_row_tile(M, row_tile)
    return pl.pallas_call(
        _cv1_kernel,
        out_shape=(jax.ShapeDtypeStruct((M, c), jnp.bfloat16),
                   jax.ShapeDtypeStruct((M, c), jnp.bfloat16)),
        grid=(pl.cdiv(M, tm),),
        in_specs=[pl.BlockSpec((tm, cin), lambda i: (i, 0)),
                  pl.BlockSpec((cin, c), lambda i: (0, 0)),
                  pl.BlockSpec((cin, c), lambda i: (0, 0)),
                  pl.BlockSpec((1, c), lambda i: (0, 0)),
                  pl.BlockSpec((1, c), lambda i: (0, 0))],
        out_specs=(pl.BlockSpec((tm, c), lambda i: (i, 0)),
                   pl.BlockSpec((tm, c), lambda i: (i, 0))),
        compiler_params=pltpu.CompilerParams(dimension_semantics=("parallel",)),
    )(x2d, wa, wb, ba, bb)


# ---------------------------------------------------------------------------
# Fused Bottleneck: 3x3 conv -> SiLU -> 3x3 conv -> SiLU (-> +x), one pallas_call.
# Grid = (N, H/TH).  The 2-row halo is brought in with four 1-row BlockSpecs whose
# index maps clamp at the image border; out-of-image rows are gated to zero.
# ---------------------------------------------------------------------------
def _make_bottleneck_kernel(TH, W, c, H, add):
    K9 = 9 * c
    K3 = 3 * c
    single_matmul = K9 <= 256       # fill the MXU contraction dim when possible

    def kernel(x_ref, t0_ref, t1_ref, b0_ref, b1_ref,
               w1_ref, bias1_ref, w2_ref, bias2_ref, o_ref):
        i = pl.program_id(1)
        nh = pl.num_programs(1)
        xm = x_ref[0]                                   # (TH, W, c) bf16

        def gate(ok, row):                              # zero rows outside the image
            return row * jnp.where(ok, 1.0, 0.0).astype(row.dtype)

        # padded input window: rows i*TH-2 .. i*TH+TH+1 (zeros outside the image)
        xfull = jnp.concatenate(
            [gate(i * TH >= 2, t0_ref[0]),
             gate(i >= 1, t1_ref[0]),
             xm,
             gate(i < nh - 1, b0_ref[0]),
             gate(i * TH + TH + 1 <= H - 1, b1_ref[0])], axis=0)   # (TH+4, W, c)

        def conv3(full, w_ref, b_ref, r):
            # full: (r+2, W, c) -> f32 (r*W, c); w_ref packed (9*c, c) in (dy,dx,cin) order
            def tap(dy, dx):
                rows = full[dy:dy + r]                  # (r, W, c)
                if dx == 0:      # x[w-1]
                    return jnp.concatenate(
                        [jnp.zeros((r, 1, c), rows.dtype), rows[:, :W - 1, :]], axis=1)
                if dx == 2:      # x[w+1]
                    return jnp.concatenate(
                        [rows[:, 1:, :], jnp.zeros((r, 1, c), rows.dtype)], axis=1)
                return rows      # x[w]

            if single_matmul:
                lhs = jnp.concatenate([tap(dy, dx) for dy in range(3) for dx in range(3)],
                                      axis=2).reshape(r * W, K9)
                acc = jnp.dot(lhs, w_ref[...], preferred_element_type=jnp.float32)
            else:
                acc = None
                for dy in range(3):
                    lhs = jnp.concatenate([tap(dy, dx) for dx in range(3)],
                                          axis=2).reshape(r * W, K3)
                    t = jnp.dot(lhs, w_ref[dy * K3:(dy + 1) * K3, :],
                                preferred_element_type=jnp.float32)
                    acc = t if acc is None else acc + t
            return acc + b_ref[...]

        # conv1 + SiLU over the TH+2 intermediate rows (kept entirely on-chip)
        h1 = conv3(xfull, w1_ref, bias1_ref, TH + 2).reshape(TH + 2, W, c)
        h1 = h1 * jax.nn.sigmoid(h1)
        # rows that correspond to conv2's zero padding at the image border
        top = h1[:1] * jnp.where(i >= 1, 1.0, 0.0)
        bot = h1[TH + 1:] * jnp.where(i < nh - 1, 1.0, 0.0)
        h1 = jnp.concatenate([top, h1[1:TH + 1], bot], axis=0).astype(xm.dtype)

        # conv2 + SiLU (+ fused residual) over the TH output rows
        y = conv3(h1, w2_ref, bias2_ref, TH).reshape(TH, W, c)
        y = y * jax.nn.sigmoid(y)
        if add:
            y = y + xm.astype(jnp.float32)
        o_ref[...] = y.reshape(1, TH, W, c).astype(o_ref.dtype)

    return kernel


def bottleneck_fused(x, w1, b1, w2, b2, add=False, h_tile=None):
    """x: (N, H, W, c) bf16; w1/w2: (9*c, c) bf16 (BN folded); b1/b2: (1, c) f32."""
    N, H, W, c = x.shape
    cap = h_tile if h_tile is not None else _auto_h_tile(N, H, W, c)
    TH = _pick_h_tile(H, cap)
    nh = H // TH
    kernel = _make_bottleneck_kernel(TH, W, c, H, add)

    return pl.pallas_call(
        kernel,
        out_shape=jax.ShapeDtypeStruct((N, H, W, c), jnp.bfloat16),
        grid=(N, nh),
        in_specs=[
            pl.BlockSpec((1, TH, W, c), lambda n, i: (n, i, 0, 0)),
            # 1-row halos (block size 1 along H -> block index == row index, clamped)
            pl.BlockSpec((1, 1, W, c), lambda n, i: (n, jnp.maximum(i * TH - 2, 0), 0, 0)),
            pl.BlockSpec((1, 1, W, c), lambda n, i: (n, jnp.maximum(i * TH - 1, 0), 0, 0)),
            pl.BlockSpec((1, 1, W, c), lambda n, i: (n, jnp.minimum(i * TH + TH, H - 1), 0, 0)),
            pl.BlockSpec((1, 1, W, c), lambda n, i: (n, jnp.minimum(i * TH + TH + 1, H - 1), 0, 0)),
            pl.BlockSpec((9 * c, c), lambda n, i: (0, 0)),
            pl.BlockSpec((1, c), lambda n, i: (0, 0)),
            pl.BlockSpec((9 * c, c), lambda n, i: (0, 0)),
            pl.BlockSpec((1, c), lambda n, i: (0, 0)),
        ],
        out_specs=pl.BlockSpec((1, TH, W, c), lambda n, i: (n, i, 0, 0)),
        compiler_params=pltpu.CompilerParams(
            dimension_semantics=("parallel", "parallel")),
    )(x, x, x, x, x, w1, b1, w2, b2)


# ---------------------------------------------------------------------------
# fused concat + cv2: one matmul per c-channel chunk of cv2's weight, accumulated
# in-kernel (the (2+n)*c concat tensor never exists in HBM); bf16 output.
# ---------------------------------------------------------------------------
def _make_cv2_kernel(num_chunks):
    def kernel(*refs):
        y_refs = refs[:num_chunks]
        w_refs = refs[num_chunks:2 * num_chunks]
        b_ref = refs[2 * num_chunks]
        o_ref = refs[2 * num_chunks + 1]
        acc = jnp.dot(y_refs[0][...], w_refs[0][...], preferred_element_type=jnp.float32)
        for k in range(1, num_chunks):
            acc = acc + jnp.dot(y_refs[k][...], w_refs[k][...],
                                preferred_element_type=jnp.float32)
        y = acc + b_ref[...]
        o_ref[...] = (y * jax.nn.sigmoid(y)).astype(o_ref.dtype)
    return kernel


def conv1x1_concat_fused(ys2d, w_chunks, b, row_tile=2048):
    M, c = ys2d[0].shape
    c2 = w_chunks[0].shape[1]
    k = len(ys2d)
    tm = _pick_row_tile(M, row_tile)
    in_specs = ([pl.BlockSpec((tm, c), lambda i: (i, 0)) for _ in range(k)]
                + [pl.BlockSpec((c, c2), lambda i: (0, 0)) for _ in range(k)]
                + [pl.BlockSpec((1, c2), lambda i: (0, 0))])
    return pl.pallas_call(
        _make_cv2_kernel(k),
        out_shape=jax.ShapeDtypeStruct((M, c2), jnp.bfloat16),
        grid=(pl.cdiv(M, tm),),
        in_specs=in_specs,
        out_specs=pl.BlockSpec((tm, c2), lambda i: (i, 0)),
        compiler_params=pltpu.CompilerParams(dimension_semantics=("parallel",)),
    )(*ys2d, *w_chunks, b)


# ---------------------------------------------------------------------------
# Parameter init (deterministic, synthetic) with inference-mode BN folded in.
# ---------------------------------------------------------------------------
def init_c2f_params(key, c1, c2, n=1, e=0.5):
    c = int(c2 * e)
    keys = iter(jax.random.split(key, 16 + 16 * n))

    def folded_bn(cout):
        gamma = 1.0 + 0.1 * jax.random.normal(next(keys), (cout,), jnp.float32)
        beta = 0.1 * jax.random.normal(next(keys), (cout,), jnp.float32)
        mean = 0.1 * jax.random.normal(next(keys), (cout,), jnp.float32)
        var = jax.random.uniform(next(keys), (cout,), jnp.float32, 0.5, 1.5)
        scale = gamma / jnp.sqrt(var + BN_EPS)
        bias = beta - mean * scale
        return scale, bias

    params = {"c": c, "n": n}

    # cv1 (1x1): pre-split into two lane-dense chunks
    w = jax.random.normal(next(keys), (c1, 2 * c), jnp.float32) / math.sqrt(c1)
    s, b = folded_bn(2 * c)
    wf = (w * s[None, :]).astype(jnp.bfloat16)
    bf = b.reshape(1, 2 * c)
    params["cv1_wa"], params["cv1_wb"] = wf[:, :c], wf[:, c:]
    params["cv1_ba"], params["cv1_bb"] = bf[:, :c], bf[:, c:]

    # bottleneck 3x3 convs: (ky, kx, cin, cout) -> (9*cin, cout), taps packed into K
    bnecks = []
    for _ in range(n):
        bp = {}
        for tag in ("1", "2"):
            w = jax.random.normal(next(keys), (3, 3, c, c), jnp.float32) / math.sqrt(9 * c)
            s, b = folded_bn(c)
            bp["w" + tag] = (w * s[None, None, None, :]).reshape(9 * c, c).astype(jnp.bfloat16)
            bp["b" + tag] = b.reshape(1, c)
        bnecks.append(bp)
    params["bottlenecks"] = bnecks

    # cv2 (1x1 over the concat), stored as (2+n) chunks of c rows each
    w = jax.random.normal(next(keys), ((2 + n) * c, c2), jnp.float32) / math.sqrt((2 + n) * c)
    s, b = folded_bn(c2)
    wf = (w * s[None, :]).astype(jnp.bfloat16)
    params["cv2_w_chunks"] = [wf[k * c:(k + 1) * c, :] for k in range(2 + n)]
    params["cv2_b"] = b.reshape(1, c2)
    return params


# ---------------------------------------------------------------------------
# C2f forward (matches PyTorch C2f, g=1; BN in inference mode)
# ---------------------------------------------------------------------------
def c2f_forward(x_nchw, params, shortcut=False, h_tile=None, row_tile=2048):
    x = jnp.transpose(x_nchw.astype(jnp.bfloat16), (0, 2, 3, 1))   # NCHW -> NHWC (bf16)
    N, H, W, _ = x.shape
    c = params["c"]
    M = N * H * W

    a2d, b2d = conv1x1_split(x.reshape(M, -1), params["cv1_wa"], params["cv1_wb"],
                             params["cv1_ba"], params["cv1_bb"], row_tile=row_tile)

    ys2d = [a2d, b2d]
    cur = b2d.reshape(N, H, W, c)
    for bp in params["bottlenecks"]:
        cur = bottleneck_fused(cur, bp["w1"], bp["b1"], bp["w2"], bp["b2"],
                               add=shortcut, h_tile=h_tile)
        ys2d.append(cur.reshape(M, c))

    out2d = conv1x1_concat_fused(ys2d, params["cv2_w_chunks"], params["cv2_b"],
                                 row_tile=row_tile)
    out = out2d.reshape(N, H, W, -1)
    # transpose the largest tensor in bf16, cast for the f32 consumer last
    return jnp.transpose(out, (0, 3, 1, 2)).astype(jnp.float32)


# ---------------------------------------------------------------------------
# Pure-JAX f32 reference (uses the same bf16-rounded folded parameters)
# ---------------------------------------------------------------------------
def _ref_conv1x1(x, w, b):
    y = jnp.einsum("nhwc,cd->nhwd", x, w, precision=jax.lax.Precision.HIGHEST) + b
    return y * jax.nn.sigmoid(y)


def _ref_conv3x3(x, w9, b):
    N, H, W, cin = x.shape
    cout = w9.shape[-1]
    w = w9.astype(jnp.float32).reshape(3, 3, cin, cout)
    xp = jnp.pad(x, ((0, 0), (1, 1), (1, 1), (0, 0)))
    acc = jnp.zeros((N, H, W, cout), jnp.float32)
    for dy in range(3):
        for dx in range(3):
            acc = acc + jnp.einsum("nhwc,cd->nhwd",
                                   xp[:, dy:dy + H, dx:dx + W, :], w[dy, dx],
                                   precision=jax.lax.Precision.HIGHEST)
    y = acc + b
    return y * jax.nn.sigmoid(y)


def c2f_reference(x_nchw, params, shortcut=False):
    x = jnp.transpose(x_nchw, (0, 2, 3, 1)).astype(jnp.bfloat16).astype(jnp.float32)
    c = params["c"]
    w1 = jnp.concatenate([params["cv1_wa"], params["cv1_wb"]], axis=1).astype(jnp.float32)
    b1 = jnp.concatenate([params["cv1_ba"], params["cv1_bb"]], axis=1)
    y0 = _ref_conv1x1(x, w1, b1)
    ys = [y0[..., :c], y0[..., c:]]
    for bp in params["bottlenecks"]:
        h = _ref_conv3x3(ys[-1], bp["w1"], bp["b1"])
        h = _ref_conv3x3(h, bp["w2"], bp["b2"])
        if shortcut:
            h = ys[-1] + h
        ys.append(h)
    ycat = jnp.concatenate(ys, axis=-1)
    wc = jnp.concatenate([w.astype(jnp.float32) for w in params["cv2_w_chunks"]], axis=0)
    out = _ref_conv1x1(ycat, wc, params["cv2_b"])
    return jnp.transpose(out, (0, 3, 1, 2))


if __name__ == "__main__":
    key = jax.random.PRNGKey(0)
    c1, c2_out, n = 8, 8, 1          # hidden c = 4
    N, H, W = 2, 16, 16

    params = init_c2f_params(key, c1, c2_out, n=n, e=0.5)
    x = jax.random.normal(jax.random.fold_in(key, 999), (N, c1, H, W), jnp.float32)

    # h_tile=8 -> 2 row-tiles per image: exercises both the border and interior
    # halo paths of the fused bottleneck kernel.  Also validate the fused residual.
    for shortcut in (False, True):
        out = c2f_forward(x, params, shortcut=shortcut, h_tile=8)
        out = jax.block_until_ready(out)
        assert out.shape == (N, c2_out, H, W), out.shape
        assert bool(jnp.all(jnp.isfinite(out)))

        ref = c2f_reference(x, params, shortcut=shortcut)
        err = float(jnp.max(jnp.abs(out - ref)))
        scale = float(jnp.max(jnp.abs(ref)))
        assert err <= 0.05 + 0.05 * scale, (shortcut, err, scale)

    print("KERNEL_OK")
</pallas_src>

<mosaic_0001>
module attributes {stable_mosaic.version = 11 : i64} {
  func.func @_cv1_kernel(%arg0: i32, %arg1: memref<256x8xbf16, #tpu.memory_space<vmem>>, %arg2: memref<8x4xbf16, #tpu.memory_space<vmem>>, %arg3: memref<8x4xbf16, #tpu.memory_space<vmem>>, %arg4: memref<1x4xf32, #tpu.memory_space<vmem>>, %arg5: memref<1x4xf32, #tpu.memory_space<vmem>>, %arg6: memref<256x4xbf16, #tpu.memory_space<vmem>>, %arg7: memref<256x4xbf16, #tpu.memory_space<vmem>>) attributes {dimension_semantics = [#tpu.dimension_semantics<parallel>], iteration_bounds = array<i64: 2>, scalar_prefetch = 0 : i64, scratch_operands = 0 : i64, tpu.core_type = #tpu.core_type<tc>, window_params = [{transform_indices = @transform_0, window_bounds = array<i64: 256, 8>}, {pipeline_mode = #tpu.pipeline_mode<synchronous>, transform_indices = @transform_1, window_bounds = array<i64: 8, 4>}, {pipeline_mode = #tpu.pipeline_mode<synchronous>, transform_indices = @transform_2, window_bounds = array<i64: 8, 4>}, {pipeline_mode = #tpu.pipeline_mode<synchronous>, transform_indices = @transform_3, window_bounds = array<i64: 1, 4>}, {pipeline_mode = #tpu.pipeline_mode<synchronous>, transform_indices = @transform_4, window_bounds = array<i64: 1, 4>}, {transform_indices = @transform_5, window_bounds = array<i64: 256, 4>}, {transform_indices = @transform_6, window_bounds = array<i64: 256, 4>}]} {
    %c0 = arith.constant 0 : index
    %c0_0 = arith.constant 0 : index
    %0 = vector.load %arg1[%c0, %c0_0] : memref<256x8xbf16, #tpu.memory_space<vmem>>, vector<256x8xbf16>
    %c0_1 = arith.constant 0 : index
    %c0_2 = arith.constant 0 : index
    %1 = vector.load %arg2[%c0_1, %c0_2] : memref<8x4xbf16, #tpu.memory_space<vmem>>, vector<8x4xbf16>
    %cst = arith.constant dense<0.000000e+00> : vector<256x4xf32>
    %2 = tpu.matmul %0, %1, %cst {dimension_numbers = #tpu.dot_dimension_numbers<[1], [0], [0], [1], [0, 0, 1, 1], [], []>} : vector<256x8xbf16>, vector<8x4xbf16>, vector<256x4xf32> -> vector<256x4xf32>
    %c0_3 = arith.constant 0 : index
    %c0_4 = arith.constant 0 : index
    %3 = vector.load %arg4[%c0_3, %c0_4] : memref<1x4xf32, #tpu.memory_space<vmem>>, vector<1x4xf32>
    %4 = vector.broadcast %3 : vector<1x4xf32> to vector<256x4xf32>
    %5 = arith.addf %2, %4 : vector<256x4xf32>
    %c0_5 = arith.constant 0 : index
    %c0_6 = arith.constant 0 : index
    %6 = vector.load %arg3[%c0_5, %c0_6] : memref<8x4xbf16, #tpu.memory_space<vmem>>, vector<8x4xbf16>
    %cst_7 = arith.constant dense<0.000000e+00> : vector<256x4xf32>
    %7 = tpu.matmul %0, %6, %cst_7 {dimension_numbers = #tpu.dot_dimension_numbers<[1], [0], [0], [1], [0, 0, 1, 1], [], []>} : vector<256x8xbf16>, vector<8x4xbf16>, vector<256x4xf32> -> vector<256x4xf32>
    %c0_8 = arith.constant 0 : index
    %c0_9 = arith.constant 0 : index
    %8 = vector.load %arg5[%c0_8, %c0_9] : memref<1x4xf32, #tpu.memory_space<vmem>>, vector<1x4xf32>
    %9 = vector.broadcast %8 : vector<1x4xf32> to vector<256x4xf32>
    %10 = arith.addf %7, %9 : vector<256x4xf32>
    %11 = arith.negf %5 : vector<256x4xf32>
    %12 = math.exp %11 : vector<256x4xf32>
    %cst_10 = arith.constant 1.000000e+00 : f32
    %13 = vector.broadcast %cst_10 : f32 to vector<256x4xf32>
    %14 = arith.addf %13, %12 : vector<256x4xf32>
    %15 = arith.divf %13, %14 : vector<256x4xf32>
    %16 = arith.mulf %5, %15 : vector<256x4xf32>
    %17 = arith.truncf %16 : vector<256x4xf32> to vector<256x4xbf16>
    %c0_11 = arith.constant 0 : index
    %c0_12 = arith.constant 0 : index
    %18 = vector.load %arg6[%c0_11, %c0_12] : memref<256x4xbf16, #tpu.memory_space<vmem>>, vector<256x4xbf16>
    tpu.vector_store %arg6[%c0_11, %c0_12], %17 {strides = array<i32>} : memref<256x4xbf16, #tpu.memory_space<vmem>>, vector<256x4xbf16>,
    %19 = arith.negf %10 : vector<256x4xf32>
    %20 = math.exp %19 : vector<256x4xf32>
    %cst_13 = arith.constant 1.000000e+00 : f32
    %21 = vector.broadcast %cst_13 : f32 to vector<256x4xf32>
    %22 = arith.addf %21, %20 : vector<256x4xf32>
    %23 = arith.divf %21, %22 : vector<256x4xf32>
    %24 = arith.mulf %10, %23 : vector<256x4xf32>
    %25 = arith.truncf %24 : vector<256x4xf32> to vector<256x4xbf16>
    %c0_14 = arith.constant 0 : index
    %c0_15 = arith.constant 0 : index
    %26 = vector.load %arg7[%c0_14, %c0_15] : memref<256x4xbf16, #tpu.memory_space<vmem>>, vector<256x4xbf16>
    tpu.vector_store %arg7[%c0_14, %c0_15], %25 {strides = array<i32>} : memref<256x4xbf16, #tpu.memory_space<vmem>>, vector<256x4xbf16>,
    return
  }
  func.func @transform_0(%arg0: i32) -> (i32, i32) {
    %c0_i32 = arith.constant 0 : i32
    %c0_i32_0 = arith.constant 0 : i32
    return %arg0, %c0_i32 : i32, i32
  }
  func.func @transform_1(%arg0: i32) -> (i32, i32) {
    %c0_i32 = arith.constant 0 : i32
    %c0_i32_0 = arith.constant 0 : i32
    %c0_i32_1 = arith.constant 0 : i32
    return %c0_i32, %c0_i32_0 : i32, i32
  }
  func.func @transform_2(%arg0: i32) -> (i32, i32) {
    %c0_i32 = arith.constant 0 : i32
    %c0_i32_0 = arith.constant 0 : i32
    %c0_i32_1 = arith.constant 0 : i32
    return %c0_i32, %c0_i32_0 : i32, i32
  }
  func.func @transform_3(%arg0: i32) -> (i32, i32) {
    %c0_i32 = arith.constant 0 : i32
    %c0_i32_0 = arith.constant 0 : i32
    %c0_i32_1 = arith.constant 0 : i32
    return %c0_i32, %c0_i32_0 : i32, i32
  }
  func.func @transform_4(%arg0: i32) -> (i32, i32) {
    %c0_i32 = arith.constant 0 : i32
    %c0_i32_0 = arith.constant 0 : i32
    %c0_i32_1 = arith.constant 0 : i32
    return %c0_i32, %c0_i32_0 : i32, i32
  }
  func.func @transform_5(%arg0: i32) -> (i32, i32) {
    %c0_i32 = arith.constant 0 : i32
    %c0_i32_0 = arith.constant 0 : i32
    return %arg0, %c0_i32 : i32, i32
  }
  func.func @transform_6(%arg0: i32) -> (i32, i32) {
    %c0_i32 = arith.constant 0 : i32
    %c0_i32_0 = arith.constant 0 : i32
    return %arg0, %c0_i32 : i32, i32
  }
}

</mosaic_0001>

<llo_original>
// kernel: tpu_custom_call.1
$region0: #{tpu_custom_call.1}
  #allocation0 [shape = 'u32[]', space=smem, size = 0x4, offset = 0x4, fixed_abs, tag = 'smem constant byte address 0x4 - core index']
  #allocation1 [shape = 'u32[72,128]{1,0:T(1,128)}', space=vmem, size = 0x9000, scoped, tag = 'internal scratch']
  %s0 = inlined_call_operand.vmem [shape: bf16[512,8], index: 0, kind: input, shape index: {}]
  %s1 = inlined_call_operand.vmem [shape: bf16[8,4], index: 1, kind: input, shape index: {}]
  %s2 = inlined_call_operand.vmem [shape: bf16[8,4], index: 2, kind: input, shape index: {}]
  %s3 = inlined_call_operand.vmem [shape: f32[1,4], index: 3, kind: input, shape index: {}]
  %s4 = inlined_call_operand.vmem [shape: f32[1,4], index: 4, kind: input, shape index: {}]
  %s5 = inlined_call_operand.vmem [shape: bf16[512,4], index: 5, kind: output, shape index: {0}]
  %s6 = inlined_call_operand.vmem [shape: bf16[512,4], index: 6, kind: output, shape index: {1}]
  %7 = xla_tuple %s5, %s6
  %s8 = sld [smem:[#allocation0]]
  $region61: #{tpu_custom_call.1} parent=0
    _
  %s10 = ssub.s32 1, %s8
  %s11 = scalar_select 0, %s10, %s8
  loop: start=0, step=1, limit=4
  $region2: #{tpu_custom_call.1} parent=0 // loop_pre_header
    _
  $region3: #{tpu_custom_call.1} parent=0 // loop_header
    %s13 = sphi 0, %s17
    %p14 = scmp.ge.s32.totalorder %s13, 4
    %s23 = sphi 0, %s25
    %s26 = sphi 0, %s23
    %s27 = sphi 0, %s26
    %s43 = sphi 0, %s27
    %s47 = sphi 0, %s47
    %s49 = sphi 0, %s47
    %s50 = sphi 0, %s49
    %s64 = sphi 0, %s50
    %s68 = sphi 0, %s68
    %s70 = sphi 0, %s68
    %s71 = sphi 0, %s70
    %s85 = sphi 0, %s71
    %s89 = sphi 0, %s89
    %s91 = sphi 0, %s89
    %s92 = sphi 0, %s91
    %s106 = sphi 0, %s92
    %s110 = sphi 0, %s110
    %s112 = sphi 0, %s110
    %s113 = sphi 0, %s112
    %s127 = sphi 0, %s113
    %s133 = sphi 0, %s135
    %s136 = sphi 0, %s133
    %s137 = sphi 0, %s136
    %s153 = sphi 0, %s137
    %s159 = sphi 0, %s161
    %s162 = sphi 0, %s159
    %s163 = sphi 0, %s162
    %s179 = sphi 0, %s163
  $region4: #{tpu_custom_call.1} parent=0 // loop_header_branch
    %16 = sbr.rel (%p14) target = $region8
  $region5: #{tpu_custom_call.1} parent=0 // loop_body
    %s18 = ssub.s32 %s13, 1
    %s19 = ssub.s32 %s13, 2
    %s20 = sadd.s32 %s13, 1
    %s21 = ssub.s32 %s13, %s20
    %p22 = scmp.eq.s32.totalorder %s21, 0
    %s24 = sadd.s32 %s23, 1
    %s25 = scalar_select %p22, %s23, %s24
    %p28 = pneg %p22
    %p29 = scmp.eq.s32.totalorder %s13, 1
    %p30 = por %p28, %p29
    %p31 = scmp.ne.s32.totalorder %s23, %s26
    %p32 = scmp.eq.s32.totalorder %s13, 0
    %p33 = por %p31, %p32
    %p34 = scmp.ne.s32.totalorder %s23, %s26
    %p35 = scmp.eq.s32.totalorder %s18, 1
    %p36 = por %p34, %p35
    %p37 = scmp.ne.s32.totalorder %s26, %s27
    %p38 = scmp.eq.s32.totalorder %s18, 0
    %p39 = por %p37, %p38
    %p40 = scmp.ne.s32.totalorder %s26, %s27
    %p41 = scmp.eq.s32.totalorder %s19, 1
    %p42 = por %p40, %p41
    %p44 = scmp.ne.s32.totalorder %s27, %s43
    %p45 = scmp.eq.s32.totalorder %s19, 0
    %p46 = por %p44, %p45
    %s48 = sadd.s32 %s47, 1
    %p51 = scmp.eq.s32.totalorder %s13, 1
    %p52 = scmp.ne.s32.totalorder %s47, %s49
    %p53 = scmp.eq.s32.totalorder %s13, 0
    %p54 = por %p52, %p53
    %p55 = scmp.ne.s32.totalorder %s47, %s49
    %p56 = scmp.eq.s32.totalorder %s18, 1
    %p57 = por %p55, %p56
    %p58 = scmp.ne.s32.totalorder %s49, %s50
    %p59 = scmp.eq.s32.totalorder %s18, 0
    %p60 = por %p58, %p59
    %p61 = scmp.ne.s32.totalorder %s49, %s50
    %p62 = scmp.eq.s32.totalorder %s19, 1
    %p63 = por %p61, %p62
    %p65 = scmp.ne.s32.totalorder %s50, %s64
    %p66 = scmp.eq.s32.totalorder %s19, 0
    %p67 = por %p65, %p66
    %s69 = sadd.s32 %s68, 1
    %p72 = scmp.eq.s32.totalorder %s13, 1
    %p73 = scmp.ne.s32.totalorder %s68, %s70
    %p74 = scmp.eq.s32.totalorder %s13, 0
    %p75 = por %p73, %p74
    %p76 = scmp.ne.s32.totalorder %s68, %s70
    %p77 = scmp.eq.s32.totalorder %s18, 1
    %p78 = por %p76, %p77
    %p79 = scmp.ne.s32.totalorder %s70, %s71
    %p80 = scmp.eq.s32.totalorder %s18, 0
    %p81 = por %p79, %p80
    %p82 = scmp.ne.s32.totalorder %s70, %s71
    %p83 = scmp.eq.s32.totalorder %s19, 1
    %p84 = por %p82, %p83
    %p86 = scmp.ne.s32.totalorder %s71, %s85
    %p87 = scmp.eq.s32.totalorder %s19, 0
    %p88 = por %p86, %p87
    %s90 = sadd.s32 %s89, 1
    %p93 = scmp.eq.s32.totalorder %s13, 1
    %p94 = scmp.ne.s32.totalorder %s89, %s91
    %p95 = scmp.eq.s32.totalorder %s13, 0
    %p96 = por %p94, %p95
    %p97 = scmp.ne.s32.totalorder %s89, %s91
    %p98 = scmp.eq.s32.totalorder %s18, 1
    %p99 = por %p97, %p98
    %p100 = scmp.ne.s32.totalorder %s91, %s92
    %p101 = scmp.eq.s32.totalorder %s18, 0
    %p102 = por %p100, %p101
    %p103 = scmp.ne.s32.totalorder %s91, %s92
    %p104 = scmp.eq.s32.totalorder %s19, 1
    %p105 = por %p103, %p104
    %p107 = scmp.ne.s32.totalorder %s92, %s106
    %p108 = scmp.eq.s32.totalorder %s19, 0
    %p109 = por %p107, %p108
    %s111 = sadd.s32 %s110, 1
    %p114 = scmp.eq.s32.totalorder %s13, 1
    %p115 = scmp.ne.s32.totalorder %s110, %s112
    %p116 = scmp.eq.s32.totalorder %s13, 0
    %p117 = por %p115, %p116
    %p118 = scmp.ne.s32.totalorder %s110, %s112
    %p119 = scmp.eq.s32.totalorder %s18, 1
    %p120 = por %p118, %p119
    %p121 = scmp.ne.s32.totalorder %s112, %s113
    %p122 = scmp.eq.s32.totalorder %s18, 0
    %p123 = por %p121, %p122
    %p124 = scmp.ne.s32.totalorder %s112, %s113
    %p125 = scmp.eq.s32.totalorder %s19, 1
    %p126 = por %p124, %p125
    %p128 = scmp.ne.s32.totalorder %s113, %s127
    %p129 = scmp.eq.s32.totalorder %s19, 0
    %p130 = por %p128, %p129
    %s131 = ssub.s32 %s13, %s20
    %p132 = scmp.eq.s32.totalorder %s131, 0
    %s134 = sadd.s32 %s133, 1
    %s135 = scalar_select %p132, %s133, %s134
    %p138 = pneg %p132
    %p139 = scmp.eq.s32.totalorder %s13, 1
    %p140 = por %p138, %p139
    %p141 = scmp.ne.s32.totalorder %s133, %s136
    %p142 = scmp.eq.s32.totalorder %s13, 0
    %p143 = por %p141, %p142
    %p144 = scmp.ne.s32.totalorder %s133, %s136
    %p145 = scmp.eq.s32.totalorder %s18, 1
    %p146 = por %p144, %p145
    %p147 = scmp.ne.s32.totalorder %s136, %s137
    %p148 = scmp.eq.s32.totalorder %s18, 0
    %p149 = por %p147, %p148
    %p150 = scmp.ne.s32.totalorder %s136, %s137
    %p151 = scmp.eq.s32.totalorder %s19, 1
    %p152 = por %p150, %p151
    %p154 = scmp.ne.s32.totalorder %s137, %s153
    %p155 = scmp.eq.s32.totalorder %s19, 0
    %p156 = por %p154, %p155
    %s157 = ssub.s32 %s13, %s20
    %p158 = scmp.eq.s32.totalorder %s157, 0
    %s160 = sadd.s32 %s159, 1
    %s161 = scalar_select %p158, %s159, %s160
    %p164 = pneg %p158
    %p165 = scmp.eq.s32.totalorder %s13, 1
    %p166 = por %p164, %p165
    %p167 = scmp.ne.s32.totalorder %s159, %s162
    %p168 = scmp.eq.s32.totalorder %s13, 0
    %p169 = por %p167, %p168
    %p170 = scmp.ne.s32.totalorder %s159, %s162
    %p171 = scmp.eq.s32.totalorder %s18, 1
    %p172 = por %p170, %p171
    %p173 = scmp.ne.s32.totalorder %s162, %s163
    %p174 = scmp.eq.s32.totalorder %s18, 0
    %p175 = por %p173, %p174
    %p176 = scmp.ne.s32.totalorder %s162, %s163
    %p177 = scmp.eq.s32.totalorder %s19, 1
    %p178 = por %p176, %p177
    %p180 = scmp.ne.s32.totalorder %s163, %s179
    %p181 = scmp.eq.s32.totalorder %s19, 0
    %p182 = por %p180, %p181
    %p183 = scmp.le.s32.totalorder 1, %s13
    %p184 = scmp.lt.s32.totalorder %s13, 3
    %p185 = pnand %p183, %p184
    %p186 = pneg %p185
    // Predicated region
    $region9: #{tpu_custom_call.1} parent=5 // pred_check
      _
    $region10: #{tpu_custom_call.1} parent=5 // pred_check_branch
      %188 = sbr.rel (%p185) target = $region12
    $region11: #{tpu_custom_call.1} parent=5 // pred_region
      %s189 = ssub.s32 %s13, 1
      // Predicated region
      $region13: #{tpu_custom_call.1} parent=11 // pred_check
        %p190 = pneg %p60
      $region14: #{tpu_custom_call.1} parent=11 // pred_check_branch
        %192 = sbr.rel (%p190) target = $region16
      $region15: #{tpu_custom_call.1} parent=11 // pred_region
        _
      $region16: #{tpu_custom_call.1} parent=11 // pred_fallthru
        _
      // Predicated region
      $region17: #{tpu_custom_call.1} parent=11 // pred_check
        %p193 = pneg %p81
      $region18: #{tpu_custom_call.1} parent=11 // pred_check_branch
        %195 = sbr.rel (%p193) target = $region20
      $region19: #{tpu_custom_call.1} parent=11 // pred_region
        _
      $region20: #{tpu_custom_call.1} parent=11 // pred_fallthru
        _
      // Predicated region
      $region21: #{tpu_custom_call.1} parent=11 // pred_check
        %p196 = pneg %p102
      $region22: #{tpu_custom_call.1} parent=11 // pred_check_branch
        %198 = sbr.rel (%p196) target = $region24
      $region23: #{tpu_custom_call.1} parent=11 // pred_region
        _
      $region24: #{tpu_custom_call.1} parent=11 // pred_fallthru
        _
      // Predicated region
      $region25: #{tpu_custom_call.1} parent=11 // pred_check
        %p199 = pneg %p123
      $region26: #{tpu_custom_call.1} parent=11 // pred_check_branch
        %201 = sbr.rel (%p199) target = $region28
      $region27: #{tpu_custom_call.1} parent=11 // pred_region
        _
      $region28: #{tpu_custom_call.1} parent=11 // pred_fallthru
        _
    $region12: #{tpu_custom_call.1} parent=5 // pred_fallthru
      _
    %p202 = scmp.lt.s32.totalorder %s13, 2
    // Predicated region
    $region29: #{tpu_custom_call.1} parent=5 // pred_check
      %p203 = pneg %p202
    $region30: #{tpu_custom_call.1} parent=5 // pred_check_branch
      %205 = sbr.rel (%p203) target = $region32
    $region31: #{tpu_custom_call.1} parent=5 // pred_region
      // Predicated region
      $region33: #{tpu_custom_call.1} parent=31 // pred_check
        %p206 = pneg %p33
      $region34: #{tpu_custom_call.1} parent=31 // pred_check_branch
        %208 = sbr.rel (%p206) target = $region36
      $region35: #{tpu_custom_call.1} parent=31 // pred_region
        %s209 = smul.u32 32, %s13
        %p210 = scmp.lt.s32.totalorder %s209, 63
        %s211 = scalar_select %p210, %s209, 63
        %s212 = smul.addr %s211, 4
        %s213 = scalar_lea.vmem %s0, %s212
        %s214 = smul.u32 32, %s13
      $region36: #{tpu_custom_call.1} parent=31 // pred_fallthru
        _
    $region32: #{tpu_custom_call.1} parent=5 // pred_fallthru
      _
    %p215 = scmp.le.s32.totalorder 1, %s13
    %p216 = scmp.lt.s32.totalorder %s13, 3
    %p217 = pnand %p215, %p216
    %p218 = pneg %p217
    // Predicated region
    $region37: #{tpu_custom_call.1} parent=5 // pred_check
      _
    $region38: #{tpu_custom_call.1} parent=5 // pred_check_branch
      %220 = sbr.rel (%p217) target = $region40
    $region39: #{tpu_custom_call.1} parent=5 // pred_region
      %s221 = ssub.s32 %s13, 1
      %s222 = smul.u32 32, %s18
      %p223 = scmp.lt.s32.totalorder %s222, 63
      %s224 = scalar_select %p223, %s222, 63
      %s225 = smul.addr %s224, 4
      %s226 = scalar_lea.vmem %s0, %s225
      %p227 = pneg %p39
      %p228 = pneg %p36
      %p229 = pneg %p60
      %p230 = pneg %p57
      %p231 = pneg %p81
      %p232 = pneg %p78
      %p233 = pneg %p102
      %p234 = pneg %p99
      %p235 = pneg %p123
      %p236 = pneg %p120
      %p237 = pneg %p149
      %p238 = pneg %p146
      %s239 = smul.u32 32, %s18
      %p240 = scmp.lt.s32.totalorder %s239, 63
      %s241 = scalar_select %p240, %s239, 63
      %s242 = smul.addr %s241, 4
      %s243 = scalar_lea.vmem %s5, %s242
      %p244 = pneg %p175
      %p245 = pneg %p172
      %s246 = smul.u32 32, %s18
      %p247 = scmp.lt.s32.totalorder %s246, 63
      %s248 = scalar_select %p247, %s246, 63
      %s249 = smul.addr %s248, 4
      %s250 = scalar_lea.vmem %s6, %s249
      %s251 = smul.u32 32, %s18
      %p252 = scmp.lt.s32.totalorder %s251, 63
      %s253 = scalar_select %p252, %s251, 63
      %s254 = smul.addr %s253, 4
      %s255 = scalar_lea.vmem %s0, %s254
      %s256 = smul.u32 32, %s18
      %s257 = smul.u32 32, %s18
      %p258 = scmp.lt.s32.totalorder %s257, 63
      %s259 = scalar_select %p258, %s257, 63
      %s260 = smul.addr %s259, 4
      %s261 = scalar_lea.vmem %s5, %s260
      %s262 = smul.u32 32, %s18
      %s263 = smul.u32 32, %s18
      %p264 = scmp.lt.s32.totalorder %s263, 63
      %s265 = scalar_select %p264, %s263, 63
      %s266 = smul.addr %s265, 4
      %s267 = scalar_lea.vmem %s6, %s266
      %s268 = smul.u32 32, %s18
      %v270 = vld [vmem:[%s255] sm:$0xf]
      %v271 = vld [vmem:[%s255 + $0x4] sm:$0xf]
      %v272 = vld [vmem:[%s255 + $0x8] sm:$0xf]
      %v273 = vld [vmem:[%s255 + $0xc] sm:$0xf]
      %v274 = vld [vmem:[%s255 + $0x10] sm:$0xf]
      %v275 = vld [vmem:[%s255 + $0x14] sm:$0xf]
      %v276 = vld [vmem:[%s255 + $0x18] sm:$0xf]
      %v277 = vld [vmem:[%s255 + $0x1c] sm:$0xf]
      %v278 = vld [vmem:[%s255 + $0x20] sm:$0xf]
      %v279 = vld [vmem:[%s255 + $0x24] sm:$0xf]
      %v280 = vld [vmem:[%s255 + $0x28] sm:$0xf]
      %v281 = vld [vmem:[%s255 + $0x2c] sm:$0xf]
      %v282 = vld [vmem:[%s255 + $0x30] sm:$0xf]
      %v283 = vld [vmem:[%s255 + $0x34] sm:$0xf]
      %v284 = vld [vmem:[%s255 + $0x38] sm:$0xf]
      %v285 = vld [vmem:[%s255 + $0x3c] sm:$0xf]
      %v286 = vld [vmem:[%s255 + $0x40] sm:$0xf]
      %v287 = vld [vmem:[%s255 + $0x44] sm:$0xf]
      %v288 = vld [vmem:[%s255 + $0x48] sm:$0xf]
      %v289 = vld [vmem:[%s255 + $0x4c] sm:$0xf]
      %v290 = vld [vmem:[%s255 + $0x50] sm:$0xf]
      %v291 = vld [vmem:[%s255 + $0x54] sm:$0xf]
      %v292 = vld [vmem:[%s255 + $0x58] sm:$0xf]
      %v293 = vld [vmem:[%s255 + $0x5c] sm:$0xf]
      %v294 = vld [vmem:[%s255 + $0x60] sm:$0xf]
      %v295 = vld [vmem:[%s255 + $0x64] sm:$0xf]
      %v296 = vld [vmem:[%s255 + $0x68] sm:$0xf]
      %v297 = vld [vmem:[%s255 + $0x6c] sm:$0xf]
      %v298 = vld [vmem:[%s255 + $0x70] sm:$0xf]
      %v299 = vld [vmem:[%s255 + $0x74] sm:$0xf]
      %v300 = vld [vmem:[%s255 + $0x78] sm:$0xf]
      %v301 = vld [vmem:[%s255 + $0x7c] sm:$0xf]
      %v302 = vld [vmem:[%s1] sm:$0xf]
      %v303 = vld [vmem:[%s3] sm:$0x1]
      %v305 = vperm.slane %v303, 0
      %v339 = vunpack.c.l.b16 %v270
      %v340 = vunpack.c.l.b16 %v271
      %v341 = vunpack.c.l.b16 %v272
      %v342 = vunpack.c.l.b16 %v273
      %v343 = vunpack.c.l.b16 %v274
      %v344 = vunpack.c.l.b16 %v275
      %v345 = vunpack.c.l.b16 %v276
      %v346 = vunpack.c.l.b16 %v277
      %v347 = vunpack.c.l.b16 %v278
      %v348 = vunpack.c.l.b16 %v279
      %v349 = vunpack.c.l.b16 %v280
      %v350 = vunpack.c.l.b16 %v281
      %v351 = vunpack.c.l.b16 %v282
      %v352 = vunpack.c.l.b16 %v283
      %v353 = vunpack.c.l.b16 %v284
      %v354 = vunpack.c.l.b16 %v285
      %v355 = vunpack.c.l.b16 %v286
      %v356 = vunpack.c.l.b16 %v287
      %v357 = vunpack.c.l.b16 %v288
      %v358 = vunpack.c.l.b16 %v289
      %v359 = vunpack.c.l.b16 %v290
      %v360 = vunpack.c.l.b16 %v291
      %v361 = vunpack.c.l.b16 %v292
      %v362 = vunpack.c.l.b16 %v293
      %v363 = vunpack.c.l.b16 %v294
      %v364 = vunpack.c.l.b16 %v295
      %v365 = vunpack.c.l.b16 %v296
      %v366 = vunpack.c.l.b16 %v297
      %v367 = vunpack.c.l.b16 %v298
      %v368 = vunpack.c.l.b16 %v299
      %v369 = vunpack.c.l.b16 %v300
      %v370 = vunpack.c.l.b16 %v301
      %v371 = vpack.c.b16 %v340, %v339
      %v372 = vpack.c.b16 %v342, %v341
      %v373 = vpack.c.b16 %v344, %v343
      %v374 = vpack.c.b16 %v346, %v345
      %v375 = vpack.c.b16 %v348, %v347
      %v376 = vpack.c.b16 %v350, %v349
      %v377 = vpack.c.b16 %v352, %v351
      %v378 = vpack.c.b16 %v354, %v353
      %v379 = vpack.c.b16 %v356, %v355
      %v380 = vpack.c.b16 %v358, %v357
      %v381 = vpack.c.b16 %v360, %v359
      %v382 = vpack.c.b16 %v362, %v361
      %v383 = vpack.c.b16 %v364, %v363
      %v384 = vpack.c.b16 %v366, %v365
      %v385 = vpack.c.b16 %v368, %v367
      %v386 = vpack.c.b16 %v370, %v369
      %vm387 = vcmask 64512
      %v389 = vsel %vm387, %v371, 0
      %v392 = vsel %vm387, %v372, 0
      %v395 = vsel %vm387, %v373, 0
      %v398 = vsel %vm387, %v374, 0
      %v401 = vsel %vm387, %v375, 0
      %v404 = vsel %vm387, %v376, 0
      %v407 = vsel %vm387, %v377, 0
      %v410 = vsel %vm387, %v378, 0
      %v413 = vsel %vm387, %v379, 0
      %v416 = vsel %vm387, %v380, 0
      %v419 = vsel %vm387, %v381, 0
      %v422 = vsel %vm387, %v382, 0
      %v425 = vsel %vm387, %v383, 0
      %v428 = vsel %vm387, %v384, 0
      %v431 = vsel %vm387, %v385, 0
      %v434 = vsel %vm387, %v386, 0
      %vm436 = vcmask 1043456
      %v438 = vsel %vm436, %v302, 0
      %440 = vmatpush.bf16.msra.mxu0 0
      %441 = vmatpush.bf16.msra.mxu0 0
      %442 = vmatpush.bf16.msra.mxu0 0
      %443 = vmatpush.bf16.msra.mxu0 0
      %444 = vmatpush.bf16.msra.mxu0 0
      %445 = vmatpush.bf16.msra.mxu0 0
      %446 = vmatpush.bf16.msra.mxu0 0
      %447 = vmatpush.bf16.msra.mxu0 %v438
      %448 = vmatmul.bf16.gmra.mxu0 %v389
      %v449 = vpop.f32.mrf.mxu0
      %v450 = vadd.f32 %v305, %v449
      %v451 = vpop.f32.mrf.mxu0
      %v452 = vadd.f32 %v305, %v451
      %453 = vmatmul.bf16.gmra.mxu0 %v392
      %v454 = vpop.f32.mrf.mxu0
      %v455 = vadd.f32 %v305, %v454
      %v456 = vpop.f32.mrf.mxu0
      %v457 = vadd.f32 %v305, %v456
      %458 = vmatmul.bf16.gmra.mxu0 %v395
      %v459 = vpop.f32.mrf.mxu0
      %v460 = vadd.f32 %v305, %v459
      %v461 = vpop.f32.mrf.mxu0
      %v462 = vadd.f32 %v305, %v461
      %463 = vmatmul.bf16.gmra.mxu0 %v398
      %v464 = vpop.f32.mrf.mxu0
      %v465 = vadd.f32 %v305, %v464
      %v466 = vpop.f32.mrf.mxu0
      %v467 = vadd.f32 %v305, %v466
      %468 = vmatmul.bf16.gmra.mxu0 %v401
      %v469 = vpop.f32.mrf.mxu0
      %v470 = vadd.f32 %v305, %v469
      %v471 = vpop.f32.mrf.mxu0
      %v472 = vadd.f32 %v305, %v471
      %473 = vmatmul.bf16.gmra.mxu0 %v404
      %v474 = vpop.f32.mrf.mxu0
      %v475 = vadd.f32 %v305, %v474
      %v476 = vpop.f32.mrf.mxu0
      %v477 = vadd.f32 %v305, %v476
      %478 = vmatmul.bf16.gmra.mxu0 %v407
      %v479 = vpop.f32.mrf.mxu0
      %v480 = vadd.f32 %v305, %v479
      %v481 = vpop.f32.mrf.mxu0
      %v482 = vadd.f32 %v305, %v481
      %483 = vmatmul.bf16.gmra.mxu0 %v410
      %v484 = vpop.f32.mrf.mxu0
      %v485 = vadd.f32 %v305, %v484
      %v486 = vpop.f32.mrf.mxu0
      %v487 = vadd.f32 %v305, %v486
      %488 = vmatmul.bf16.gmra.mxu0 %v413
      %v489 = vpop.f32.mrf.mxu0
      %v490 = vadd.f32 %v305, %v489
      %v491 = vpop.f32.mrf.mxu0
      %v492 = vadd.f32 %v305, %v491
      %493 = vmatmul.bf16.gmra.mxu0 %v416
      %v494 = vpop.f32.mrf.mxu0
      %v495 = vadd.f32 %v305, %v494
      %v496 = vpop.f32.mrf.mxu0
      %v497 = vadd.f32 %v305, %v496
      %498 = vmatmul.bf16.gmra.mxu0 %v419
      %v499 = vpop.f32.mrf.mxu0
      %v500 = vadd.f32 %v305, %v499
      %v501 = vpop.f32.mrf.mxu0
      %v502 = vadd.f32 %v305, %v501
      %503 = vmatmul.bf16.gmra.mxu0 %v422
      %v504 = vpop.f32.mrf.mxu0
      %v505 = vadd.f32 %v305, %v504
      %v506 = vpop.f32.mrf.mxu0
      %v507 = vadd.f32 %v305, %v506
      %508 = vmatmul.bf16.gmra.mxu0 %v425
      %v509 = vpop.f32.mrf.mxu0
      %v510 = vadd.f32 %v305, %v509
      %v511 = vpop.f32.mrf.mxu0
      %v512 = vadd.f32 %v305, %v511
      %513 = vmatmul.bf16.gmra.mxu0 %v428
      %v514 = vpop.f32.mrf.mxu0
      %v515 = vadd.f32 %v305, %v514
      %v516 = vpop.f32.mrf.mxu0
      %v517 = vadd.f32 %v305, %v516
      %518 = vmatmul.bf16.gmra.mxu0 %v431
      %v519 = vpop.f32.mrf.mxu0
      %v520 = vadd.f32 %v305, %v519
      %v521 = vpop.f32.mrf.mxu0
      %v522 = vadd.f32 %v305, %v521
      %523 = vmatmul.bf16.gmra.mxu0 %v434
      %v524 = vpop.f32.mrf.mxu0
      %v525 = vadd.f32 %v305, %v524
      %v526 = vpop.f32.mrf.mxu0
      %v527 = vadd.f32 %v305, %v526
      %528 = vdwg.mxu0
      %v529 = vld [vmem:[%s2] sm:$0xf]
      %v530 = vld [vmem:[%s4] sm:$0x1]
      %v532 = vperm.slane %v530, 0
      %v535 = vsel %vm436, %v529, 0
      %537 = vmatpush.bf16.msra.mxu0 0
      %538 = vmatpush.bf16.msra.mxu0 0
      %539 = vmatpush.bf16.msra.mxu0 0
      %540 = vmatpush.bf16.msra.mxu0 0
      %541 = vmatpush.bf16.msra.mxu0 0
      %542 = vmatpush.bf16.msra.mxu0 0
      %543 = vmatpush.bf16.msra.mxu0 0
      %544 = vmatpush.bf16.msra.mxu0 %v535
      %545 = vmatmul.bf16.gmra.mxu0 %v389
      %v546 = vpop.f32.mrf.mxu0
      %v547 = vadd.f32 %v532, %v546
      %v548 = vpop.f32.mrf.mxu0
      %v549 = vadd.f32 %v532, %v548
      %550 = vmatmul.bf16.gmra.mxu0 %v392
      %v551 = vpop.f32.mrf.mxu0
      %v552 = vadd.f32 %v532, %v551
      %v553 = vpop.f32.mrf.mxu0
      %v554 = vadd.f32 %v532, %v553
      %555 = vmatmul.bf16.gmra.mxu0 %v395
      %v556 = vpop.f32.mrf.mxu0
      %v557 = vadd.f32 %v532, %v556
      %v558 = vpop.f32.mrf.mxu0
      %v559 = vadd.f32 %v532, %v558
      %560 = vmatmul.bf16.gmra.mxu0 %v398
      %v561 = vpop.f32.mrf.mxu0
      %v562 = vadd.f32 %v532, %v561
      %v563 = vpop.f32.mrf.mxu0
      %v564 = vadd.f32 %v532, %v563
      %565 = vmatmul.bf16.gmra.mxu0 %v401
      %v566 = vpop.f32.mrf.mxu0
      %v567 = vadd.f32 %v532, %v566
      %v568 = vpop.f32.mrf.mxu0
      %v569 = vadd.f32 %v532, %v568
      %570 = vmatmul.bf16.gmra.mxu0 %v404
      %v571 = vpop.f32.mrf.mxu0
      %v572 = vadd.f32 %v532, %v571
      %v573 = vpop.f32.mrf.mxu0
      %v574 = vadd.f32 %v532, %v573
      %575 = vmatmul.bf16.gmra.mxu0 %v407
      %v576 = vpop.f32.mrf.mxu0
      %v577 = vadd.f32 %v532, %v576
      %v578 = vpop.f32.mrf.mxu0
      %v579 = vadd.f32 %v532, %v578
      %580 = vmatmul.bf16.gmra.mxu0 %v410
      %v581 = vpop.f32.mrf.mxu0
      %v582 = vadd.f32 %v532, %v581
      %v583 = vpop.f32.mrf.mxu0
      %v584 = vadd.f32 %v532, %v583
      %585 = vmatmul.bf16.gmra.mxu0 %v413
      %v586 = vpop.f32.mrf.mxu0
      %v587 = vadd.f32 %v532, %v586
      %v588 = vpop.f32.mrf.mxu0
      %v589 = vadd.f32 %v532, %v588
      %590 = vmatmul.bf16.gmra.mxu0 %v416
      %v591 = vpop.f32.mrf.mxu0
      %v592 = vadd.f32 %v532, %v591
      %v593 = vpop.f32.mrf.mxu0
      %v594 = vadd.f32 %v532, %v593
      %595 = vmatmul.bf16.gmra.mxu0 %v419
      %v596 = vpop.f32.mrf.mxu0
      %v597 = vadd.f32 %v532, %v596
      %v598 = vpop.f32.mrf.mxu0
      %v599 = vadd.f32 %v532, %v598
      %600 = vmatmul.bf16.gmra.mxu0 %v422
      %v601 = vpop.f32.mrf.mxu0
      %v602 = vadd.f32 %v532, %v601
      %v603 = vpop.f32.mrf.mxu0
      %v604 = vadd.f32 %v532, %v603
      %605 = vmatmul.bf16.gmra.mxu0 %v425
      %v606 = vpop.f32.mrf.mxu0
      %v607 = vadd.f32 %v532, %v606
      %v608 = vpop.f32.mrf.mxu0
      %v609 = vadd.f32 %v532, %v608
      %610 = vmatmul.bf16.gmra.mxu0 %v428
      %v611 = vpop.f32.mrf.mxu0
      %v612 = vadd.f32 %v532, %v611
      %v613 = vpop.f32.mrf.mxu0
      %v614 = vadd.f32 %v532, %v613
      %615 = vmatmul.bf16.gmra.mxu0 %v431
      %v616 = vpop.f32.mrf.mxu0
      %v617 = vadd.f32 %v532, %v616
      %v618 = vpop.f32.mrf.mxu0
      %v619 = vadd.f32 %v532, %v618
      %620 = vmatmul.bf16.gmra.mxu0 %v434
      %v621 = vpop.f32.mrf.mxu0
      %v622 = vadd.f32 %v532, %v621
      %v623 = vpop.f32.mrf.mxu0
      %v624 = vadd.f32 %v532, %v623
      %625 = vdwg.mxu0
      %v626 = vxor.u32 %v450, 2147483648
      %v627 = vxor.u32 %v452, 2147483648
      %v628 = vxor.u32 %v455, 2147483648
      %v629 = vxor.u32 %v457, 2147483648
      %v630 = vxor.u32 %v460, 2147483648
      %v631 = vxor.u32 %v462, 2147483648
      %v632 = vxor.u32 %v465, 2147483648
      %v633 = vxor.u32 %v467, 2147483648
      %v634 = vxor.u32 %v470, 2147483648
      %v635 = vxor.u32 %v472, 2147483648
      %v636 = vxor.u32 %v475, 2147483648
      %v637 = vxor.u32 %v477, 2147483648
      %v638 = vxor.u32 %v480, 2147483648
      %v639 = vxor.u32 %v482, 2147483648
      %v640 = vxor.u32 %v485, 2147483648
      %v641 = vxor.u32 %v487, 2147483648
      %v642 = vxor.u32 %v490, 2147483648
      %v643 = vxor.u32 %v492, 2147483648
      %v644 = vxor.u32 %v495, 2147483648
      %v645 = vxor.u32 %v497, 2147483648
      %v646 = vxor.u32 %v500, 2147483648
      %v647 = vxor.u32 %v502, 2147483648
      %v648 = vxor.u32 %v505, 2147483648
      %v649 = vxor.u32 %v507, 2147483648
      %v650 = vxor.u32 %v510, 2147483648
      %v651 = vxor.u32 %v512, 2147483648
      %v652 = vxor.u32 %v515, 2147483648
      %v653 = vxor.u32 %v517, 2147483648
      %v654 = vxor.u32 %v520, 2147483648
      %v655 = vxor.u32 %v522, 2147483648
      %v656 = vxor.u32 %v525, 2147483648
      %v657 = vxor.u32 %v527, 2147483648
      %v658 = vmul.f32 %v626, 1.442695
      %v659 = vpow.pop %v658
      %v660 = vmul.f32 %v627, 1.442695
      %v661 = vpow.pop %v660
      %v662 = vmul.f32 %v628, 1.442695
      %v663 = vpow.pop %v662
      %v664 = vmul.f32 %v629, 1.442695
      %v665 = vpow.pop %v664
      %v666 = vmul.f32 %v630, 1.442695
      %v667 = vpow.pop %v666
      %v668 = vmul.f32 %v631, 1.442695
      %v669 = vpow.pop %v668
      %v670 = vmul.f32 %v632, 1.442695
      %v671 = vpow.pop %v670
      %v672 = vmul.f32 %v633, 1.442695
      %v673 = vpow.pop %v672
      %v674 = vmul.f32 %v634, 1.442695
      %v675 = vpow.pop %v674
      %v676 = vmul.f32 %v635, 1.442695
      %v677 = vpow.pop %v676
      %v678 = vmul.f32 %v636, 1.442695
      %v679 = vpow.pop %v678
      %v680 = vmul.f32 %v637, 1.442695
      %v681 = vpow.pop %v680
      %v682 = vmul.f32 %v638, 1.442695
      %v683 = vpow.pop %v682
      %v684 = vmul.f32 %v639, 1.442695
      %v685 = vpow.pop %v684
      %v686 = vmul.f32 %v640, 1.442695
      %v687 = vpow.pop %v686
      %v688 = vmul.f32 %v641, 1.442695
      %v689 = vpow.pop %v688
      %v690 = vmul.f32 %v642, 1.442695
      %v691 = vpow.pop %v690
      %v692 = vmul.f32 %v643, 1.442695
      %v693 = vpow.pop %v692
      %v694 = vmul.f32 %v644, 1.442695
      %v695 = vpow.pop %v694
      %v696 = vmul.f32 %v645, 1.442695
      %v697 = vpow.pop %v696
      %v698 = vmul.f32 %v646, 1.442695
      %v699 = vpow.pop %v698
      %v700 = vmul.f32 %v647, 1.442695
      %v701 = vpow.pop %v700
      %v702 = vmul.f32 %v648, 1.442695
      %v703 = vpow.pop %v702
      %v704 = vmul.f32 %v649, 1.442695
      %v705 = vpow.pop %v704
      %v706 = vmul.f32 %v650, 1.442695
      %v707 = vpow.pop %v706
      %v708 = vmul.f32 %v651, 1.442695
      %v709 = vpow.pop %v708
      %v710 = vmul.f32 %v652, 1.442695
      %v711 = vpow.pop %v710
      %v712 = vmul.f32 %v653, 1.442695
      %v713 = vpow.pop %v712
      %v714 = vmul.f32 %v654, 1.442695
      %v715 = vpow.pop %v714
      %v716 = vmul.f32 %v655, 1.442695
      %v717 = vpow.pop %v716
      %v718 = vmul.f32 %v656, 1.442695
      %v719 = vpow.pop %v718
      %v720 = vmul.f32 %v657, 1.442695
      %v721 = vpow.pop %v720
      %v722 = vadd.f32 %v659, 1.0
      %v723 = vadd.f32 %v661, 1.0
      %v724 = vadd.f32 %v663, 1.0
      %v725 = vadd.f32 %v665, 1.0
      %v726 = vadd.f32 %v667, 1.0
      %v727 = vadd.f32 %v669, 1.0
      %v728 = vadd.f32 %v671, 1.0
      %v729 = vadd.f32 %v673, 1.0
      %v730 = vadd.f32 %v675, 1.0
      %v731 = vadd.f32 %v677, 1.0
      %v732 = vadd.f32 %v679, 1.0
      %v733 = vadd.f32 %v681, 1.0
      %v734 = vadd.f32 %v683, 1.0
      %v735 = vadd.f32 %v685, 1.0
      %v736 = vadd.f32 %v687, 1.0
      %v737 = vadd.f32 %v689, 1.0
      %v738 = vadd.f32 %v691, 1.0
      %v739 = vadd.f32 %v693, 1.0
      %v740 = vadd.f32 %v695, 1.0
      %v741 = vadd.f32 %v697, 1.0
      %v742 = vadd.f32 %v699, 1.0
      %v743 = vadd.f32 %v701, 1.0
      %v744 = vadd.f32 %v703, 1.0
      %v745 = vadd.f32 %v705, 1.0
      %v746 = vadd.f32 %v707, 1.0
      %v747 = vadd.f32 %v709, 1.0
      %v748 = vadd.f32 %v711, 1.0
      %v749 = vadd.f32 %v713, 1.0
      %v750 = vadd.f32 %v715, 1.0
      %v751 = vadd.f32 %v717, 1.0
      %v752 = vadd.f32 %v719, 1.0
      %v753 = vadd.f32 %v721, 1.0
      %v754 = vrcp.pop %v722
      %v755 = vmul.f32 %v722, %v754
      %v756 = vsub.f32 1.0, %v755
      %v757 = vmul.f32 %v754, %v756
      %v758 = vadd.f32 %v754, %v757
      %vm759 = vweird.f32 %v722
      %vm760 = vweird.f32 %v754
      %vm761 = vmor %vm759, %vm760
      %v762 = vsel %vm761, %v754, %v758
      %v763 = vand.u32 2147483647, %v722
      %vm764 = vcmp.eq.f32.partialorder %v763, 8.507059e+37
      %v765 = vand.u32 %v722, 2147483648
      %v766 = vor.u32 1.1754944e-38, %v765
      %v767 = vsel %vm764, %v766, %v762
      %v768 = vmul.f32 1.0, %v767
      %v769 = vrcp.pop %v723
      %v770 = vmul.f32 %v723, %v769
      %v771 = vsub.f32 1.0, %v770
      %v772 = vmul.f32 %v769, %v771
      %v773 = vadd.f32 %v769, %v772
      %vm774 = vweird.f32 %v723
      %vm775 = vweird.f32 %v769
      %vm776 = vmor %vm774, %vm775
      %v777 = vsel %vm776, %v769, %v773
      %v778 = vand.u32 2147483647, %v723
      %vm779 = vcmp.eq.f32.partialorder %v778, 8.507059e+37
      %v780 = vand.u32 %v723, 2147483648
      %v781 = vor.u32 1.1754944e-38, %v780
      %v782 = vsel %vm779, %v781, %v777
      %v783 = vmul.f32 1.0, %v782
      %v784 = vrcp.pop %v724
      %v785 = vmul.f32 %v724, %v784
      %v786 = vsub.f32 1.0, %v785
      %v787 = vmul.f32 %v784, %v786
      %v788 = vadd.f32 %v784, %v787
      %vm789 = vweird.f32 %v724
      %vm790 = vweird.f32 %v784
      %vm791 = vmor %vm789, %vm790
      %v792 = vsel %vm791, %v784, %v788
      %v793 = vand.u32 2147483647, %v724
      %vm794 = vcmp.eq.f32.partialorder %v793, 8.507059e+37
      %v795 = vand.u32 %v724, 2147483648
      %v796 = vor.u32 1.1754944e-38, %v795
      %v797 = vsel %vm794, %v796, %v792
      %v798 = vmul.f32 1.0, %v797
      %v799 = vrcp.pop %v725
      %v800 = vmul.f32 %v725, %v799
      %v801 = vsub.f32 1.0, %v800
      %v802 = vmul.f32 %v799, %v801
      %v803 = vadd.f32 %v799, %v802
      %vm804 = vweird.f32 %v725
      %vm805 = vweird.f32 %v799
      %vm806 = vmor %vm804, %vm805
      %v807 = vsel %vm806, %v799, %v803
      %v808 = vand.u32 2147483647, %v725
      %vm809 = vcmp.eq.f32.partialorder %v808, 8.507059e+37
      %v810 = vand.u32 %v725, 2147483648
      %v811 = vor.u32 1.1754944e-38, %v810
      %v812 = vsel %vm809, %v811, %v807
      %v813 = vmul.f32 1.0, %v812
      %v814 = vrcp.pop %v726
      %v815 = vmul.f32 %v726, %v814
      %v816 = vsub.f32 1.0, %v815
      %v817 = vmul.f32 %v814, %v816
      %v818 = vadd.f32 %v814, %v817
      %vm819 = vweird.f32 %v726
      %vm820 = vweird.f32 %v814
      %vm821 = vmor %vm819, %vm820
      %v822 = vsel %vm821, %v814, %v818
      %v823 = vand.u32 2147483647, %v726
      %vm824 = vcmp.eq.f32.partialorder %v823, 8.507059e+37
      %v825 = vand.u32 %v726, 2147483648
      %v826 = vor.u32 1.1754944e-38, %v825
      %v827 = vsel %vm824, %v826, %v822
      %v828 = vmul.f32 1.0, %v827
      %v829 = vrcp.pop %v727
      %v830 = vmul.f32 %v727, %v829
      %v831 = vsub.f32 1.0, %v830
      %v832 = vmul.f32 %v829, %v831
      %v833 = vadd.f32 %v829, %v832
      %vm834 = vweird.f32 %v727
      %vm835 = vweird.f32 %v829
      %vm836 = vmor %vm834, %vm835
      %v837 = vsel %vm836, %v829, %v833
      %v838 = vand.u32 2147483647, %v727
      %vm839 = vcmp.eq.f32.partialorder %v838, 8.507059e+37
      %v840 = vand.u32 %v727, 2147483648
      %v841 = vor.u32 1.1754944e-38, %v840
      %v842 = vsel %vm839, %v841, %v837
      %v843 = vmul.f32 1.0, %v842
      %v844 = vrcp.pop %v728
      %v845 = vmul.f32 %v728, %v844
      %v846 = vsub.f32 1.0, %v845
      %v847 = vmul.f32 %v844, %v846
      %v848 = vadd.f32 %v844, %v847
      %vm849 = vweird.f32 %v728
      %vm850 = vweird.f32 %v844
      %vm851 = vmor %vm849, %vm850
      %v852 = vsel %vm851, %v844, %v848
      %v853 = vand.u32 2147483647, %v728
      %vm854 = vcmp.eq.f32.partialorder %v853, 8.507059e+37
      %v855 = vand.u32 %v728, 2147483648
      %v856 = vor.u32 1.1754944e-38, %v855
      %v857 = vsel %vm854, %v856, %v852
      %v858 = vmul.f32 1.0, %v857
      %v859 = vrcp.pop %v729
      %v860 = vmul.f32 %v729, %v859
      %v861 = vsub.f32 1.0, %v860
      %v862 = vmul.f32 %v859, %v861
      %v863 = vadd.f32 %v859, %v862
      %vm864 = vweird.f32 %v729
      %vm865 = vweird.f32 %v859
      %vm866 = vmor %vm864, %vm865
      %v867 = vsel %vm866, %v859, %v863
      %v868 = vand.u32 2147483647, %v729
      %vm869 = vcmp.eq.f32.partialorder %v868, 8.507059e+37
      %v870 = vand.u32 %v729, 2147483648
      %v871 = vor.u32 1.1754944e-38, %v870
      %v872 = vsel %vm869, %v871, %v867
      %v873 = vmul.f32 1.0, %v872
      %v874 = vrcp.pop %v730
      %v875 = vmul.f32 %v730, %v874
      %v876 = vsub.f32 1.0, %v875
      %v877 = vmul.f32 %v874, %v876
      %v878 = vadd.f32 %v874, %v877
      %vm879 = vweird.f32 %v730
      %vm880 = vweird.f32 %v874
      %vm881 = vmor %vm879, %vm880
      %v882 = vsel %vm881, %v874, %v878
      %v883 = vand.u32 2147483647, %v730
      %vm884 = vcmp.eq.f32.partialorder %v883, 8.507059e+37
      %v885 = vand.u32 %v730, 2147483648
      %v886 = vor.u32 1.1754944e-38, %v885
      %v887 = vsel %vm884, %v886, %v882
      %v888 = vmul.f32 1.0, %v887
      %v889 = vrcp.pop %v731
      %v890 = vmul.f32 %v731, %v889
      %v891 = vsub.f32 1.0, %v890
      %v892 = vmul.f32 %v889, %v891
      %v893 = vadd.f32 %v889, %v892
      %vm894 = vweird.f32 %v731
      %vm895 = vweird.f32 %v889
      %vm896 = vmor %vm894, %vm895
      %v897 = vsel %vm896, %v889, %v893
      %v898 = vand.u32 2147483647, %v731
      %vm899 = vcmp.eq.f32.partialorder %v898, 8.507059e+37
      %v900 = vand.u32 %v731, 2147483648
      %v901 = vor.u32 1.1754944e-38, %v900
      %v902 = vsel %vm899, %v901, %v897
      %v903 = vmul.f32 1.0, %v902
      %v904 = vrcp.pop %v732
      %v905 = vmul.f32 %v732, %v904
      %v906 = vsub.f32 1.0, %v905
      %v907 = vmul.f32 %v904, %v906
      %v908 = vadd.f32 %v904, %v907
      %vm909 = vweird.f32 %v732
      %vm910 = vweird.f32 %v904
      %vm911 = vmor %vm909, %vm910
      %v912 = vsel %vm911, %v904, %v908
      %v913 = vand.u32 2147483647, %v732
      %vm914 = vcmp.eq.f32.partialorder %v913, 8.507059e+37
      %v915 = vand.u32 %v732, 2147483648
      %v916 = vor.u32 1.1754944e-38, %v915
      %v917 = vsel %vm914, %v916, %v912
      %v918 = vmul.f32 1.0, %v917
      %v919 = vrcp.pop %v733
      %v920 = vmul.f32 %v733, %v919
      %v921 = vsub.f32 1.0, %v920
      %v922 = vmul.f32 %v919, %v921
      %v923 = vadd.f32 %v919, %v922
      %vm924 = vweird.f32 %v733
      %vm925 = vweird.f32 %v919
      %vm926 = vmor %vm924, %vm925
      %v927 = vsel %vm926, %v919, %v923
      %v928 = vand.u32 2147483647, %v733
      %vm929 = vcmp.eq.f32.partialorder %v928, 8.507059e+37
      %v930 = vand.u32 %v733, 2147483648
      %v931 = vor.u32 1.1754944e-38, %v930
      %v932 = vsel %vm929, %v931, %v927
      %v933 = vmul.f32 1.0, %v932
      %v934 = vrcp.pop %v734
      %v935 = vmul.f32 %v734, %v934
      %v936 = vsub.f32 1.0, %v935
      %v937 = vmul.f32 %v934, %v936
      %v938 = vadd.f32 %v934, %v937
      %vm939 = vweird.f32 %v734
      %vm940 = vweird.f32 %v934
      %vm941 = vmor %vm939, %vm940
      %v942 = vsel %vm941, %v934, %v938
      %v943 = vand.u32 2147483647, %v734
      %vm944 = vcmp.eq.f32.partialorder %v943, 8.507059e+37
      %v945 = vand.u32 %v734, 2147483648
      %v946 = vor.u32 1.1754944e-38, %v945
      %v947 = vsel %vm944, %v946, %v942
      %v948 = vmul.f32 1.0, %v947
      %v949 = vrcp.pop %v735
      %v950 = vmul.f32 %v735, %v949
      %v951 = vsub.f32 1.0, %v950
      %v952 = vmul.f32 %v949, %v951
      %v953 = vadd.f32 %v949, %v952
      %vm954 = vweird.f32 %v735
      %vm955 = vweird.f32 %v949
      %vm956 = vmor %vm954, %vm955
      %v957 = vsel %vm956, %v949, %v953
      %v958 = vand.u32 2147483647, %v735
      %vm959 = vcmp.eq.f32.partialorder %v958, 8.507059e+37
      %v960 = vand.u32 %v735, 2147483648
      %v961 = vor.u32 1.1754944e-38, %v960
      %v962 = vsel %vm959, %v961, %v957
      %v963 = vmul.f32 1.0, %v962
      %v964 = vrcp.pop %v736
      %v965 = vmul.f32 %v736, %v964
      %v966 = vsub.f32 1.0, %v965
      %v967 = vmul.f32 %v964, %v966
      %v968 = vadd.f32 %v964, %v967
      %vm969 = vweird.f32 %v736
      %vm970 = vweird.f32 %v964
      %vm971 = vmor %vm969, %vm970
      %v972 = vsel %vm971, %v964, %v968
      %v973 = vand.u32 2147483647, %v736
      %vm974 = vcmp.eq.f32.partialorder %v973, 8.507059e+37
      %v975 = vand.u32 %v736, 2147483648
      %v976 = vor.u32 1.1754944e-38, %v975
      %v977 = vsel %vm974, %v976, %v972
      %v978 = vmul.f32 1.0, %v977
      %v979 = vrcp.pop %v737
      %v980 = vmul.f32 %v737, %v979
      %v981 = vsub.f32 1.0, %v980
      %v982 = vmul.f32 %v979, %v981
      %v983 = vadd.f32 %v979, %v982
      %vm984 = vweird.f32 %v737
      %vm985 = vweird.f32 %v979
      %vm986 = vmor %vm984, %vm985
      %v987 = vsel %vm986, %v979, %v983
      %v988 = vand.u32 2147483647, %v737
      %vm989 = vcmp.eq.f32.partialorder %v988, 8.507059e+37
      %v990 = vand.u32 %v737, 2147483648
      %v991 = vor.u32 1.1754944e-38, %v990
      %v992 = vsel %vm989, %v991, %v987
      %v993 = vmul.f32 1.0, %v992
      %v994 = vrcp.pop %v738
      %v995 = vmul.f32 %v738, %v994
      %v996 = vsub.f32 1.0, %v995
      %v997 = vmul.f32 %v994, %v996
      %v998 = vadd.f32 %v994, %v997
      %vm999 = vweird.f32 %v738
      %vm1000 = vweird.f32 %v994
      %vm1001 = vmor %vm999, %vm1000
      %v1002 = vsel %vm1001, %v994, %v998
      %v1003 = vand.u32 2147483647, %v738
      %vm1004 = vcmp.eq.f32.partialorder %v1003, 8.507059e+37
      %v1005 = vand.u32 %v738, 2147483648
      %v1006 = vor.u32 1.1754944e-38, %v1005
      %v1007 = vsel %vm1004, %v1006, %v1002
      %v1008 = vmul.f32 1.0, %v1007
      %v1009 = vrcp.pop %v739
      %v1010 = vmul.f32 %v739, %v1009
      %v1011 = vsub.f32 1.0, %v1010
      %v1012 = vmul.f32 %v1009, %v1011
      %v1013 = vadd.f32 %v1009, %v1012
      %vm1014 = vweird.f32 %v739
      %vm1015 = vweird.f32 %v1009
      %vm1016 = vmor %vm1014, %vm1015
      %v1017 = vsel %vm1016, %v1009, %v1013
      %v1018 = vand.u32 2147483647, %v739
      %vm1019 = vcmp.eq.f32.partialorder %v1018, 8.507059e+37
      %v1020 = vand.u32 %v739, 2147483648
      %v1021 = vor.u32 1.1754944e-38, %v1020
      %v1022 = vsel %vm1019, %v1021, %v1017
      %v1023 = vmul.f32 1.0, %v1022
      %v1024 = vrcp.pop %v740
      %v1025 = vmul.f32 %v740, %v1024
      %v1026 = vsub.f32 1.0, %v1025
      %v1027 = vmul.f32 %v1024, %v1026
      %v1028 = vadd.f32 %v1024, %v1027
      %vm1029 = vweird.f32 %v740
      %vm1030 = vweird.f32 %v1024
      %vm1031 = vmor %vm1029, %vm1030
      %v1032 = vsel %vm1031, %v1024, %v1028
      %v1033 = vand.u32 2147483647, %v740
      %vm1034 = vcmp.eq.f32.partialorder %v1033, 8.507059e+37
      %v1035 = vand.u32 %v740, 2147483648
      %v1036 = vor.u32 1.1754944e-38, %v1035
      %v1037 = vsel %vm1034, %v1036, %v1032
      %v1038 = vmul.f32 1.0, %v1037
      %v1039 = vrcp.pop %v741
      %v1040 = vmul.f32 %v741, %v1039
      %v1041 = vsub.f32 1.0, %v1040
      %v1042 = vmul.f32 %v1039, %v1041
      %v1043 = vadd.f32 %v1039, %v1042
      %vm1044 = vweird.f32 %v741
      %vm1045 = vweird.f32 %v1039
      %vm1046 = vmor %vm1044, %vm1045
      %v1047 = vsel %vm1046, %v1039, %v1043
      %v1048 = vand.u32 2147483647, %v741
      %vm1049 = vcmp.eq.f32.partialorder %v1048, 8.507059e+37
      %v1050 = vand.u32 %v741, 2147483648
      %v1051 = vor.u32 1.1754944e-38, %v1050
      %v1052 = vsel %vm1049, %v1051, %v1047
      %v1053 = vmul.f32 1.0, %v1052
      %v1054 = vrcp.pop %v742
      %v1055 = vmul.f32 %v742, %v1054
      %v1056 = vsub.f32 1.0, %v1055
      %v1057 = vmul.f32 %v1054, %v1056
      %v1058 = vadd.f32 %v1054, %v1057
      %vm1059 = vweird.f32 %v742
      %vm1060 = vweird.f32 %v1054
      %vm1061 = vmor %vm1059, %vm1060
      %v1062 = vsel %vm1061, %v1054, %v1058
      %v1063 = vand.u32 2147483647, %v742
      %vm1064 = vcmp.eq.f32.partialorder %v1063, 8.507059e+37
      %v1065 = vand.u32 %v742, 2147483648
      %v1066 = vor.u32 1.1754944e-38, %v1065
      %v1067 = vsel %vm1064, %v1066, %v1062
      %v1068 = vmul.f32 1.0, %v1067
      %v1069 = vrcp.pop %v743
      %v1070 = vmul.f32 %v743, %v1069
      %v1071 = vsub.f32 1.0, %v1070
      %v1072 = vmul.f32 %v1069, %v1071
      %v1073 = vadd.f32 %v1069, %v1072
      %vm1074 = vweird.f32 %v743
      %vm1075 = vweird.f32 %v1069
      %vm1076 = vmor %vm1074, %vm1075
      %v1077 = vsel %vm1076, %v1069, %v1073
      %v1078 = vand.u32 2147483647, %v743
      %vm1079 = vcmp.eq.f32.partialorder %v1078, 8.507059e+37
      %v1080 = vand.u32 %v743, 2147483648
      %v1081 = vor.u32 1.1754944e-38, %v1080
      %v1082 = vsel %vm1079, %v1081, %v1077
      %v1083 = vmul.f32 1.0, %v1082
      %v1084 = vrcp.pop %v744
      %v1085 = vmul.f32 %v744, %v1084
      %v1086 = vsub.f32 1.0, %v1085
      %v1087 = vmul.f32 %v1084, %v1086
      %v1088 = vadd.f32 %v1084, %v1087
      %vm1089 = vweird.f32 %v744
      %vm1090 = vweird.f32 %v1084
      %vm1091 = vmor %vm1089, %vm1090
      %v1092 = vsel %vm1091, %v1084, %v1088
      %v1093 = vand.u32 2147483647, %v744
      %vm1094 = vcmp.eq.f32.partialorder %v1093, 8.507059e+37
      %v1095 = vand.u32 %v744, 2147483648
      %v1096 = vor.u32 1.1754944e-38, %v1095
      %v1097 = vsel %vm1094, %v1096, %v1092
      %v1098 = vmul.f32 1.0, %v1097
      %v1099 = vrcp.pop %v745
      %v1100 = vmul.f32 %v745, %v1099
      %v1101 = vsub.f32 1.0, %v1100
      %v1102 = vmul.f32 %v1099, %v1101
      %v1103 = vadd.f32 %v1099, %v1102
      %vm1104 = vweird.f32 %v745
      %vm1105 = vweird.f32 %v1099
      %vm1106 = vmor %vm1104, %vm1105
      %v1107 = vsel %vm1106, %v1099, %v1103
      %v1108 = vand.u32 2147483647, %v745
      %vm1109 = vcmp.eq.f32.partialorder %v1108, 8.507059e+37
      %v1110 = vand.u32 %v745, 2147483648
      %v1111 = vor.u32 1.1754944e-38, %v1110
      %v1112 = vsel %vm1109, %v1111, %v1107
      %v1113 = vmul.f32 1.0, %v1112
      %v1114 = vrcp.pop %v746
      %v1115 = vmul.f32 %v746, %v1114
      %v1116 = vsub.f32 1.0, %v1115
      %v1117 = vmul.f32 %v1114, %v1116
      %v1118 = vadd.f32 %v1114, %v1117
      %vm1119 = vweird.f32 %v746
      %vm1120 = vweird.f32 %v1114
      %vm1121 = vmor %vm1119, %vm1120
      %v1122 = vsel %vm1121, %v1114, %v1118
      %v1123 = vand.u32 2147483647, %v746
      %vm1124 = vcmp.eq.f32.partialorder %v1123, 8.507059e+37
      %v1125 = vand.u32 %v746, 2147483648
      %v1126 = vor.u32 1.1754944e-38, %v1125
      %v1127 = vsel %vm1124, %v1126, %v1122
      %v1128 = vmul.f32 1.0, %v1127
      %v1129 = vrcp.pop %v747
      %v1130 = vmul.f32 %v747, %v1129
      %v1131 = vsub.f32 1.0, %v1130
      %v1132 = vmul.f32 %v1129, %v1131
      %v1133 = vadd.f32 %v1129, %v1132
      %vm1134 = vweird.f32 %v747
      %vm1135 = vweird.f32 %v1129
      %vm1136 = vmor %vm1134, %vm1135
      %v1137 = vsel %vm1136, %v1129, %v1133
      %v1138 = vand.u32 2147483647, %v747
      %vm1139 = vcmp.eq.f32.partialorder %v1138, 8.507059e+37
      %v1140 = vand.u32 %v747, 2147483648
      %v1141 = vor.u32 1.1754944e-38, %v1140
      %v1142 = vsel %vm1139, %v1141, %v1137
      %v1143 = vmul.f32 1.0, %v1142
      %v1144 = vrcp.pop %v748
      %v1145 = vmul.f32 %v748, %v1144
      %v1146 = vsub.f32 1.0, %v1145
      %v1147 = vmul.f32 %v1144, %v1146
      %v1148 = vadd.f32 %v1144, %v1147
      %vm1149 = vweird.f32 %v748
      %vm1150 = vweird.f32 %v1144
      %vm1151 = vmor %vm1149, %vm1150
      %v1152 = vsel %vm1151, %v1144, %v1148
      %v1153 = vand.u32 2147483647, %v748
      %vm1154 = vcmp.eq.f32.partialorder %v1153, 8.507059e+37
      %v1155 = vand.u32 %v748, 2147483648
      %v1156 = vor.u32 1.1754944e-38, %v1155
      %v1157 = vsel %vm1154, %v1156, %v1152
      %v1158 = vmul.f32 1.0, %v1157
      %v1159 = vrcp.pop %v749
      %v1160 = vmul.f32 %v749, %v1159
      %v1161 = vsub.f32 1.0, %v1160
      %v1162 = vmul.f32 %v1159, %v1161
      %v1163 = vadd.f32 %v1159, %v1162
      %vm1164 = vweird.f32 %v749
      %vm1165 = vweird.f32 %v1159
      %vm1166 = vmor %vm1164, %vm1165
      %v1167 = vsel %vm1166, %v1159, %v1163
      %v1168 = vand.u32 2147483647, %v749
      %vm1169 = vcmp.eq.f32.partialorder %v1168, 8.507059e+37
      %v1170 = vand.u32 %v749, 2147483648
      %v1171 = vor.u32 1.1754944e-38, %v1170
      %v1172 = vsel %vm1169, %v1171, %v1167
      %v1173 = vmul.f32 1.0, %v1172
      %v1174 = vrcp.pop %v750
      %v1175 = vmul.f32 %v750, %v1174
      %v1176 = vsub.f32 1.0, %v1175
      %v1177 = vmul.f32 %v1174, %v1176
      %v1178 = vadd.f32 %v1174, %v1177
      %vm1179 = vweird.f32 %v750
      %vm1180 = vweird.f32 %v1174
      %vm1181 = vmor %vm1179, %vm1180
      %v1182 = vsel %vm1181, %v1174, %v1178
      %v1183 = vand.u32 2147483647, %v750
      %vm1184 = vcmp.eq.f32.partialorder %v1183, 8.507059e+37
      %v1185 = vand.u32 %v750, 2147483648
      %v1186 = vor.u32 1.1754944e-38, %v1185
      %v1187 = vsel %vm1184, %v1186, %v1182
      %v1188 = vmul.f32 1.0, %v1187
      %v1189 = vrcp.pop %v751
      %v1190 = vmul.f32 %v751, %v1189
      %v1191 = vsub.f32 1.0, %v1190
      %v1192 = vmul.f32 %v1189, %v1191
      %v1193 = vadd.f32 %v1189, %v1192
      %vm1194 = vweird.f32 %v751
      %vm1195 = vweird.f32 %v1189
      %vm1196 = vmor %vm1194, %vm1195
      %v1197 = vsel %vm1196, %v1189, %v1193
      %v1198 = vand.u32 2147483647, %v751
      %vm1199 = vcmp.eq.f32.partialorder %v1198, 8.507059e+37
      %v1200 = vand.u32 %v751, 2147483648
      %v1201 = vor.u32 1.1754944e-38, %v1200
      %v1202 = vsel %vm1199, %v1201, %v1197
      %v1203 = vmul.f32 1.0, %v1202
      %v1204 = vrcp.pop %v752
      %v1205 = vmul.f32 %v752, %v1204
      %v1206 = vsub.f32 1.0, %v1205
      %v1207 = vmul.f32 %v1204, %v1206
      %v1208 = vadd.f32 %v1204, %v1207
      %vm1209 = vweird.f32 %v752
      %vm1210 = vweird.f32 %v1204
      %vm1211 = vmor %vm1209, %vm1210
      %v1212 = vsel %vm1211, %v1204, %v1208
      %v1213 = vand.u32 2147483647, %v752
      %vm1214 = vcmp.eq.f32.partialorder %v1213, 8.507059e+37
      %v1215 = vand.u32 %v752, 2147483648
      %v1216 = vor.u32 1.1754944e-38, %v1215
      %v1217 = vsel %vm1214, %v1216, %v1212
      %v1218 = vmul.f32 1.0, %v1217
      %v1219 = vrcp.pop %v753
      %v1220 = vmul.f32 %v753, %v1219
      %v1221 = vsub.f32 1.0, %v1220
      %v1222 = vmul.f32 %v1219, %v1221
      %v1223 = vadd.f32 %v1219, %v1222
      %vm1224 = vweird.f32 %v753
      %vm1225 = vweird.f32 %v1219
      %vm1226 = vmor %vm1224, %vm1225
      %v1227 = vsel %vm1226, %v1219, %v1223
      %v1228 = vand.u32 2147483647, %v753
      %vm1229 = vcmp.eq.f32.partialorder %v1228, 8.507059e+37
      %v1230 = vand.u32 %v753, 2147483648
      %v1231 = vor.u32 1.1754944e-38, %v1230
      %v1232 = vsel %vm1229, %v1231, %v1227
      %v1233 = vmul.f32 1.0, %v1232
      %v1234 = vmul.f32 %v450, %v768
      %v1235 = vmul.f32 %v452, %v783
      %v1236 = vmul.f32 %v455, %v798
      %v1237 = vmul.f32 %v457, %v813
      %v1238 = vmul.f32 %v460, %v828
      %v1239 = vmul.f32 %v462, %v843
      %v1240 = vmul.f32 %v465, %v858
      %v1241 = vmul.f32 %v467, %v873
      %v1242 = vmul.f32 %v470, %v888
      %v1243 = vmul.f32 %v472, %v903
      %v1244 = vmul.f32 %v475, %v918
      %v1245 = vmul.f32 %v477, %v933
      %v1246 = vmul.f32 %v480, %v948
      %v1247 = vmul.f32 %v482, %v963
      %v1248 = vmul.f32 %v485, %v978
      %v1249 = vmul.f32 %v487, %v993
      %v1250 = vmul.f32 %v490, %v1008
      %v1251 = vmul.f32 %v492, %v1023
      %v1252 = vmul.f32 %v495, %v1038
      %v1253 = vmul.f32 %v497, %v1053
      %v1254 = vmul.f32 %v500, %v1068
      %v1255 = vmul.f32 %v502, %v1083
      %v1256 = vmul.f32 %v505, %v1098
      %v1257 = vmul.f32 %v507, %v1113
      %v1258 = vmul.f32 %v510, %v1128
      %v1259 = vmul.f32 %v512, %v1143
      %v1260 = vmul.f32 %v515, %v1158
      %v1261 = vmul.f32 %v517, %v1173
      %v1262 = vmul.f32 %v520, %v1188
      %v1263 = vmul.f32 %v522, %v1203
      %v1264 = vmul.f32 %v525, %v1218
      %v1265 = vmul.f32 %v527, %v1233
      %v1266 = vpack.c.bf16 %v1234, %v1234
      %v1267 = vpack.c.bf16 %v1235, %v1235
      %v1268 = vpack.c.bf16 %v1236, %v1236
      %v1269 = vpack.c.bf16 %v1237, %v1237
      %v1270 = vpack.c.bf16 %v1238, %v1238
      %v1271 = vpack.c.bf16 %v1239, %v1239
      %v1272 = vpack.c.bf16 %v1240, %v1240
      %v1273 = vpack.c.bf16 %v1241, %v1241
      %v1274 = vpack.c.bf16 %v1242, %v1242
      %v1275 = vpack.c.bf16 %v1243, %v1243
      %v1276 = vpack.c.bf16 %v1244, %v1244
      %v1277 = vpack.c.bf16 %v1245, %v1245
      %v1278 = vpack.c.bf16 %v1246, %v1246
      %v1279 = vpack.c.bf16 %v1247, %v1247
      %v1280 = vpack.c.bf16 %v1248, %v1248
      %v1281 = vpack.c.bf16 %v1249, %v1249
      %v1282 = vpack.c.bf16 %v1250, %v1250
      %v1283 = vpack.c.bf16 %v1251, %v1251
      %v1284 = vpack.c.bf16 %v1252, %v1252
      %v1285 = vpack.c.bf16 %v1253, %v1253
      %v1286 = vpack.c.bf16 %v1254, %v1254
      %v1287 = vpack.c.bf16 %v1255, %v1255
      %v1288 = vpack.c.bf16 %v1256, %v1256
      %v1289 = vpack.c.bf16 %v1257, %v1257
      %v1290 = vpack.c.bf16 %v1258, %v1258
      %v1291 = vpack.c.bf16 %v1259, %v1259
      %v1292 = vpack.c.bf16 %v1260, %v1260
      %v1293 = vpack.c.bf16 %v1261, %v1261
      %v1294 = vpack.c.bf16 %v1262, %v1262
      %v1295 = vpack.c.bf16 %v1263, %v1263
      %v1296 = vpack.c.bf16 %v1264, %v1264
      %v1297 = vpack.c.bf16 %v1265, %v1265
      %vm1298 = vcmask 27648
      %1299 = vst.msk [vmem:[%s261] sm:$0xf] %vm1298, %v1266
      %1300 = vst.msk [vmem:[%s261 + $0x4] sm:$0xf] %vm1298, %v1267
      %1301 = vst.msk [vmem:[%s261 + $0x8] sm:$0xf] %vm1298, %v1268
      %1302 = vst.msk [vmem:[%s261 + $0xc] sm:$0xf] %vm1298, %v1269
      %1303 = vst.msk [vmem:[%s261 + $0x10] sm:$0xf] %vm1298, %v1270
      %1304 = vst.msk [vmem:[%s261 + $0x14] sm:$0xf] %vm1298, %v1271
      %1305 = vst.msk [vmem:[%s261 + $0x18] sm:$0xf] %vm1298, %v1272
      %1306 = vst.msk [vmem:[%s261 + $0x1c] sm:$0xf] %vm1298, %v1273
      %1307 = vst.msk [vmem:[%s261 + $0x20] sm:$0xf] %vm1298, %v1274
      %1308 = vst.msk [vmem:[%s261 + $0x24] sm:$0xf] %vm1298, %v1275
      %1309 = vst.msk [vmem:[%s261 + $0x28] sm:$0xf] %vm1298, %v1276
      %1310 = vst.msk [vmem:[%s261 + $0x2c] sm:$0xf] %vm1298, %v1277
      %1311 = vst.msk [vmem:[%s261 + $0x30] sm:$0xf] %vm1298, %v1278
      %1312 = vst.msk [vmem:[%s261 + $0x34] sm:$0xf] %vm1298, %v1279
      %1313 = vst.msk [vmem:[%s261 + $0x38] sm:$0xf] %vm1298, %v1280
      %1314 = vst.msk [vmem:[%s261 + $0x3c] sm:$0xf] %vm1298, %v1281
      %1315 = vst.msk [vmem:[%s261 + $0x40] sm:$0xf] %vm1298, %v1282
      %1316 = vst.msk [vmem:[%s261 + $0x44] sm:$0xf] %vm1298, %v1283
      %1317 = vst.msk [vmem:[%s261 + $0x48] sm:$0xf] %vm1298, %v1284
      %1318 = vst.msk [vmem:[%s261 + $0x4c] sm:$0xf] %vm1298, %v1285
      %1319 = vst.msk [vmem:[%s261 + $0x50] sm:$0xf] %vm1298, %v1286
      %1320 = vst.msk [vmem:[%s261 + $0x54] sm:$0xf] %vm1298, %v1287
      %1321 = vst.msk [vmem:[%s261 + $0x58] sm:$0xf] %vm1298, %v1288
      %1322 = vst.msk [vmem:[%s261 + $0x5c] sm:$0xf] %vm1298, %v1289
      %1323 = vst.msk [vmem:[%s261 + $0x60] sm:$0xf] %vm1298, %v1290
      %1324 = vst.msk [vmem:[%s261 + $0x64] sm:$0xf] %vm1298, %v1291
      %1325 = vst.msk [vmem:[%s261 + $0x68] sm:$0xf] %vm1298, %v1292
      %1326 = vst.msk [vmem:[%s261 + $0x6c] sm:$0xf] %vm1298, %v1293
      %1327 = vst.msk [vmem:[%s261 + $0x70] sm:$0xf] %vm1298, %v1294
      %1328 = vst.msk [vmem:[%s261 + $0x74] sm:$0xf] %vm1298, %v1295
      %1329 = vst.msk [vmem:[%s261 + $0x78] sm:$0xf] %vm1298, %v1296
      %1330 = vst.msk [vmem:[%s261 + $0x7c] sm:$0xf] %vm1298, %v1297
      %v1331 = vxor.u32 %v547, 2147483648
      %v1332 = vxor.u32 %v549, 2147483648
      %v1333 = vxor.u32 %v552, 2147483648
      %v1334 = vxor.u32 %v554, 2147483648
      %v1335 = vxor.u32 %v557, 2147483648
      %v1336 = vxor.u32 %v559, 2147483648
      %v1337 = vxor.u32 %v562, 2147483648
      %v1338 = vxor.u32 %v564, 2147483648
      %v1339 = vxor.u32 %v567, 2147483648
      %v1340 = vxor.u32 %v569, 2147483648
      %v1341 = vxor.u32 %v572, 2147483648
      %v1342 = vxor.u32 %v574, 2147483648
      %v1343 = vxor.u32 %v577, 2147483648
      %v1344 = vxor.u32 %v579, 2147483648
      %v1345 = vxor.u32 %v582, 2147483648
      %v1346 = vxor.u32 %v584, 2147483648
      %v1347 = vxor.u32 %v587, 2147483648
      %v1348 = vxor.u32 %v589, 2147483648
      %v1349 = vxor.u32 %v592, 2147483648
      %v1350 = vxor.u32 %v594, 2147483648
      %v1351 = vxor.u32 %v597, 2147483648
      %v1352 = vxor.u32 %v599, 2147483648
      %v1353 = vxor.u32 %v602, 2147483648
      %v1354 = vxor.u32 %v604, 2147483648
      %v1355 = vxor.u32 %v607, 2147483648
      %v1356 = vxor.u32 %v609, 2147483648
      %v1357 = vxor.u32 %v612, 2147483648
      %v1358 = vxor.u32 %v614, 2147483648
      %v1359 = vxor.u32 %v617, 2147483648
      %v1360 = vxor.u32 %v619, 2147483648
      %v1361 = vxor.u32 %v622, 2147483648
      %v1362 = vxor.u32 %v624, 2147483648
      %v1363 = vmul.f32 %v1331, 1.442695
      %v1364 = vpow.pop %v1363
      %v1365 = vmul.f32 %v1332, 1.442695
      %v1366 = vpow.pop %v1365
      %v1367 = vmul.f32 %v1333, 1.442695
      %v1368 = vpow.pop %v1367
      %v1369 = vmul.f32 %v1334, 1.442695
      %v1370 = vpow.pop %v1369
      %v1371 = vmul.f32 %v1335, 1.442695
      %v1372 = vpow.pop %v1371
      %v1373 = vmul.f32 %v1336, 1.442695
      %v1374 = vpow.pop %v1373
      %v1375 = vmul.f32 %v1337, 1.442695
      %v1376 = vpow.pop %v1375
      %v1377 = vmul.f32 %v1338, 1.442695
      %v1378 = vpow.pop %v1377
      %v1379 = vmul.f32 %v1339, 1.442695
      %v1380 = vpow.pop %v1379
      %v1381 = vmul.f32 %v1340, 1.442695
      %v1382 = vpow.pop %v1381
      %v1383 = vmul.f32 %v1341, 1.442695
      %v1384 = vpow.pop %v1383
      %v1385 = vmul.f32 %v1342, 1.442695
      %v1386 = vpow.pop %v1385
      %v1387 = vmul.f32 %v1343, 1.442695
      %v1388 = vpow.pop %v1387
      %v1389 = vmul.f32 %v1344, 1.442695
      %v1390 = vpow.pop %v1389
      %v1391 = vmul.f32 %v1345, 1.442695
      %v1392 = vpow.pop %v1391
      %v1393 = vmul.f32 %v1346, 1.442695
      %v1394 = vpow.pop %v1393
      %v1395 = vmul.f32 %v1347, 1.442695
      %v1396 = vpow.pop %v1395
      %v1397 = vmul.f32 %v1348, 1.442695
      %v1398 = vpow.pop %v1397
      %v1399 = vmul.f32 %v1349, 1.442695
      %v1400 = vpow.pop %v1399
      %v1401 = vmul.f32 %v1350, 1.442695
      %v1402 = vpow.pop %v1401
      %v1403 = vmul.f32 %v1351, 1.442695
      %v1404 = vpow.pop %v1403
      %v1405 = vmul.f32 %v1352, 1.442695
      %v1406 = vpow.pop %v1405
      %v1407 = vmul.f32 %v1353, 1.442695
      %v1408 = vpow.pop %v1407
      %v1409 = vmul.f32 %v1354, 1.442695
      %v1410 = vpow.pop %v1409
      %v1411 = vmul.f32 %v1355, 1.442695
      %v1412 = vpow.pop %v1411
      %v1413 = vmul.f32 %v1356, 1.442695
      %v1414 = vpow.pop %v1413
      %v1415 = vmul.f32 %v1357, 1.442695
      %v1416 = vpow.pop %v1415
      %v1417 = vmul.f32 %v1358, 1.442695
      %v1418 = vpow.pop %v1417
      %v1419 = vmul.f32 %v1359, 1.442695
      %v1420 = vpow.pop %v1419
      %v1421 = vmul.f32 %v1360, 1.442695
      %v1422 = vpow.pop %v1421
      %v1423 = vmul.f32 %v1361, 1.442695
      %v1424 = vpow.pop %v1423
      %v1425 = vmul.f32 %v1362, 1.442695
      %v1426 = vpow.pop %v1425
      %v1427 = vadd.f32 %v1364, 1.0
      %v1428 = vadd.f32 %v1366, 1.0
      %v1429 = vadd.f32 %v1368, 1.0
      %v1430 = vadd.f32 %v1370, 1.0
      %v1431 = vadd.f32 %v1372, 1.0
      %v1432 = vadd.f32 %v1374, 1.0
      %v1433 = vadd.f32 %v1376, 1.0
      %v1434 = vadd.f32 %v1378, 1.0
      %v1435 = vadd.f32 %v1380, 1.0
      %v1436 = vadd.f32 %v1382, 1.0
      %v1437 = vadd.f32 %v1384, 1.0
      %v1438 = vadd.f32 %v1386, 1.0
      %v1439 = vadd.f32 %v1388, 1.0
      %v1440 = vadd.f32 %v1390, 1.0
      %v1441 = vadd.f32 %v1392, 1.0
      %v1442 = vadd.f32 %v1394, 1.0
      %v1443 = vadd.f32 %v1396, 1.0
      %v1444 = vadd.f32 %v1398, 1.0
      %v1445 = vadd.f32 %v1400, 1.0
      %v1446 = vadd.f32 %v1402, 1.0
      %v1447 = vadd.f32 %v1404, 1.0
      %v1448 = vadd.f32 %v1406, 1.0
      %v1449 = vadd.f32 %v1408, 1.0
      %v1450 = vadd.f32 %v1410, 1.0
      %v1451 = vadd.f32 %v1412, 1.0
      %v1452 = vadd.f32 %v1414, 1.0
      %v1453 = vadd.f32 %v1416, 1.0
      %v1454 = vadd.f32 %v1418, 1.0
      %v1455 = vadd.f32 %v1420, 1.0
      %v1456 = vadd.f32 %v1422, 1.0
      %v1457 = vadd.f32 %v1424, 1.0
      %v1458 = vadd.f32 %v1426, 1.0
      %v1459 = vrcp.pop %v1427
      %v1460 = vmul.f32 %v1427, %v1459
      %v1461 = vsub.f32 1.0, %v1460
      %v1462 = vmul.f32 %v1459, %v1461
      %v1463 = vadd.f32 %v1459, %v1462
      %vm1464 = vweird.f32 %v1427
      %vm1465 = vweird.f32 %v1459
      %vm1466 = vmor %vm1464, %vm1465
      %v1467 = vsel %vm1466, %v1459, %v1463
      %v1468 = vand.u32 2147483647, %v1427
      %vm1469 = vcmp.eq.f32.partialorder %v1468, 8.507059e+37
      %v1470 = vand.u32 %v1427, 2147483648
      %v1471 = vor.u32 1.1754944e-38, %v1470
      %v1472 = vsel %vm1469, %v1471, %v1467
      %v1473 = vmul.f32 1.0, %v1472
      %v1474 = vrcp.pop %v1428
      %v1475 = vmul.f32 %v1428, %v1474
      %v1476 = vsub.f32 1.0, %v1475
      %v1477 = vmul.f32 %v1474, %v1476
      %v1478 = vadd.f32 %v1474, %v1477
      %vm1479 = vweird.f32 %v1428
      %vm1480 = vweird.f32 %v1474
      %vm1481 = vmor %vm1479, %vm1480
      %v1482 = vsel %vm1481, %v1474, %v1478
      %v1483 = vand.u32 2147483647, %v1428
      %vm1484 = vcmp.eq.f32.partialorder %v1483, 8.507059e+37
      %v1485 = vand.u32 %v1428, 2147483648
      %v1486 = vor.u32 1.1754944e-38, %v1485
      %v1487 = vsel %vm1484, %v1486, %v1482
      %v1488 = vmul.f32 1.0, %v1487
      %v1489 = vrcp.pop %v1429
      %v1490 = vmul.f32 %v1429, %v1489
      %v1491 = vsub.f32 1.0, %v1490
      %v1492 = vmul.f32 %v1489, %v1491
      %v1493 = vadd.f32 %v1489, %v1492
      %vm1494 = vweird.f32 %v1429
      %vm1495 = vweird.f32 %v1489
      %vm1496 = vmor %vm1494, %vm1495
      %v1497 = vsel %vm1496, %v1489, %v1493
      %v1498 = vand.u32 2147483647, %v1429
      %vm1499 = vcmp.eq.f32.partialorder %v1498, 8.507059e+37
      %v1500 = vand.u32 %v1429, 2147483648
      %v1501 = vor.u32 1.1754944e-38, %v1500
      %v1502 = vsel %vm1499, %v1501, %v1497
      %v1503 = vmul.f32 1.0, %v1502
      %v1504 = vrcp.pop %v1430
      %v1505 = vmul.f32 %v1430, %v1504
      %v1506 = vsub.f32 1.0, %v1505
      %v1507 = vmul.f32 %v1504, %v1506
      %v1508 = vadd.f32 %v1504, %v1507
      %vm1509 = vweird.f32 %v1430
      %vm1510 = vweird.f32 %v1504
      %vm1511 = vmor %vm1509, %vm1510
      %v1512 = vsel %vm1511, %v1504, %v1508
      %v1513 = vand.u32 2147483647, %v1430
      %vm1514 = vcmp.eq.f32.partialorder %v1513, 8.507059e+37
      %v1515 = vand.u32 %v1430, 2147483648
      %v1516 = vor.u32 1.1754944e-38, %v1515
      %v1517 = vsel %vm1514, %v1516, %v1512
      %v1518 = vmul.f32 1.0, %v1517
      %v1519 = vrcp.pop %v1431
      %v1520 = vmul.f32 %v1431, %v1519
      %v1521 = vsub.f32 1.0, %v1520
      %v1522 = vmul.f32 %v1519, %v1521
      %v1523 = vadd.f32 %v1519, %v1522
      %vm1524 = vweird.f32 %v1431
      %vm1525 = vweird.f32 %v1519
      %vm1526 = vmor %vm1524, %vm1525
      %v1527 = vsel %vm1526, %v1519, %v1523
      %v1528 = vand.u32 2147483647, %v1431
      %vm1529 = vcmp.eq.f32.partialorder %v1528, 8.507059e+37
      %v1530 = vand.u32 %v1431, 2147483648
      %v1531 = vor.u32 1.1754944e-38, %v1530
      %v1532 = vsel %vm1529, %v1531, %v1527
      %v1533 = vmul.f32 1.0, %v1532
      %v1534 = vrcp.pop %v1432
      %v1535 = vmul.f32 %v1432, %v1534
      %v1536 = vsub.f32 1.0, %v1535
      %v1537 = vmul.f32 %v1534, %v1536
      %v1538 = vadd.f32 %v1534, %v1537
      %vm1539 = vweird.f32 %v1432
      %vm1540 = vweird.f32 %v1534
      %vm1541 = vmor %vm1539, %vm1540
      %v1542 = vsel %vm1541, %v1534, %v1538
      %v1543 = vand.u32 2147483647, %v1432
      %vm1544 = vcmp.eq.f32.partialorder %v1543, 8.507059e+37
      %v1545 = vand.u32 %v1432, 2147483648
      %v1546 = vor.u32 1.1754944e-38, %v1545
      %v1547 = vsel %vm1544, %v1546, %v1542
      %v1548 = vmul.f32 1.0, %v1547
      %v1549 = vrcp.pop %v1433
      %v1550 = vmul.f32 %v1433, %v1549
      %v1551 = vsub.f32 1.0, %v1550
      %v1552 = vmul.f32 %v1549, %v1551
      %v1553 = vadd.f32 %v1549, %v1552
      %vm1554 = vweird.f32 %v1433
      %vm1555 = vweird.f32 %v1549
      %vm1556 = vmor %vm1554, %vm1555
      %v1557 = vsel %vm1556, %v1549, %v1553
      %v1558 = vand.u32 2147483647, %v1433
      %vm1559 = vcmp.eq.f32.partialorder %v1558, 8.507059e+37
      %v1560 = vand.u32 %v1433, 2147483648
      %v1561 = vor.u32 1.1754944e-38, %v1560
      %v1562 = vsel %vm1559, %v1561, %v1557
      %v1563 = vmul.f32 1.0, %v1562
      %v1564 = vrcp.pop %v1434
      %v1565 = vmul.f32 %v1434, %v1564
      %v1566 = vsub.f32 1.0, %v1565
      %v1567 = vmul.f32 %v1564, %v1566
      %v1568 = vadd.f32 %v1564, %v1567
      %vm1569 = vweird.f32 %v1434
      %vm1570 = vweird.f32 %v1564
      %vm1571 = vmor %vm1569, %vm1570
      %v1572 = vsel %vm1571, %v1564, %v1568
      %v1573 = vand.u32 2147483647, %v1434
      %vm1574 = vcmp.eq.f32.partialorder %v1573, 8.507059e+37
      %v1575 = vand.u32 %v1434, 2147483648
      %v1576 = vor.u32 1.1754944e-38, %v1575
      %v1577 = vsel %vm1574, %v1576, %v1572
      %v1578 = vmul.f32 1.0, %v1577
      %v1579 = vrcp.pop %v1435
      %v1580 = vmul.f32 %v1435, %v1579
      %v1581 = vsub.f32 1.0, %v1580
      %v1582 = vmul.f32 %v1579, %v1581
      %v1583 = vadd.f32 %v1579, %v1582
      %vm1584 = vweird.f32 %v1435
      %vm1585 = vweird.f32 %v1579
      %vm1586 = vmor %vm1584, %vm1585
      %v1587 = vsel %vm1586, %v1579, %v1583
      %v1588 = vand.u32 2147483647, %v1435
      %vm1589 = vcmp.eq.f32.partialorder %v1588, 8.507059e+37
      %v1590 = vand.u32 %v1435, 2147483648
      %v1591 = vor.u32 1.1754944e-38, %v1590
      %v1592 = vsel %vm1589, %v1591, %v1587
      %v1593 = vmul.f32 1.0, %v1592
      %v1594 = vrcp.pop %v1436
      %v1595 = vmul.f32 %v1436, %v1594
      %v1596 = vsub.f32 1.0, %v1595
      %v1597 = vmul.f32 %v1594, %v1596
      %v1598 = vadd.f32 %v1594, %v1597
      %vm1599 = vweird.f32 %v1436
      %vm1600 = vweird.f32 %v1594
      %vm1601 = vmor %vm1599, %vm1600
      %v1602 = vsel %vm1601, %v1594, %v1598
      %v1603 = vand.u32 2147483647, %v1436
      %vm1604 = vcmp.eq.f32.partialorder %v1603, 8.507059e+37
      %v1605 = vand.u32 %v1436, 2147483648
      %v1606 = vor.u32 1.1754944e-38, %v1605
      %v1607 = vsel %vm1604, %v1606, %v1602
      %v1608 = vmul.f32 1.0, %v1607
      %v1609 = vrcp.pop %v1437
      %v1610 = vmul.f32 %v1437, %v1609
      %v1611 = vsub.f32 1.0, %v1610
      %v1612 = vmul.f32 %v1609, %v1611
      %v1613 = vadd.f32 %v1609, %v1612
      %vm1614 = vweird.f32 %v1437
      %vm1615 = vweird.f32 %v1609
      %vm1616 = vmor %vm1614, %vm1615
      %v1617 = vsel %vm1616, %v1609, %v1613
      %v1618 = vand.u32 2147483647, %v1437
      %vm1619 = vcmp.eq.f32.partialorder %v1618, 8.507059e+37
      %v1620 = vand.u32 %v1437, 2147483648
      %v1621 = vor.u32 1.1754944e-38, %v1620
      %v1622 = vsel %vm1619, %v1621, %v1617
      %v1623 = vmul.f32 1.0, %v1622
      %v1624 = vrcp.pop %v1438
      %v1625 = vmul.f32 %v1438, %v1624
      %v1626 = vsub.f32 1.0, %v1625
      %v1627 = vmul.f32 %v1624, %v1626
      %v1628 = vadd.f32 %v1624, %v1627
      %vm1629 = vweird.f32 %v1438
      %vm1630 = vweird.f32 %v1624
      %vm1631 = vmor %vm1629, %vm1630
      %v1632 = vsel %vm1631, %v1624, %v1628
      %v1633 = vand.u32 2147483647, %v1438
      %vm1634 = vcmp.eq.f32.partialorder %v1633, 8.507059e+37
      %v1635 = vand.u32 %v1438, 2147483648
      %v1636 = vor.u32 1.1754944e-38, %v1635
      %v1637 = vsel %vm1634, %v1636, %v1632
      %v1638 = vmul.f32 1.0, %v1637
      %v1639 = vrcp.pop %v1439
      %v1640 = vmul.f32 %v1439, %v1639
      %v1641 = vsub.f32 1.0, %v1640
      %v1642 = vmul.f32 %v1639, %v1641
      %v1643 = vadd.f32 %v1639, %v1642
      %vm1644 = vweird.f32 %v1439
      %vm1645 = vweird.f32 %v1639
      %vm1646 = vmor %vm1644, %vm1645
      %v1647 = vsel %vm1646, %v1639, %v1643
      %v1648 = vand.u32 2147483647, %v1439
      %vm1649 = vcmp.eq.f32.partialorder %v1648, 8.507059e+37
      %v1650 = vand.u32 %v1439, 2147483648
      %v1651 = vor.u32 1.1754944e-38, %v1650
      %v1652 = vsel %vm1649, %v1651, %v1647
      %v1653 = vmul.f32 1.0, %v1652
      %v1654 = vrcp.pop %v1440
      %v1655 = vmul.f32 %v1440, %v1654
      %v1656 = vsub.f32 1.0, %v1655
      %v1657 = vmul.f32 %v1654, %v1656
      %v1658 = vadd.f32 %v1654, %v1657
      %vm1659 = vweird.f32 %v1440
      %vm1660 = vweird.f32 %v1654
      %vm1661 = vmor %vm1659, %vm1660
      %v1662 = vsel %vm1661, %v1654, %v1658
      %v1663 = vand.u32 2147483647, %v1440
      %vm1664 = vcmp.eq.f32.partialorder %v1663, 8.507059e+37
      %v1665 = vand.u32 %v1440, 2147483648
      %v1666 = vor.u32 1.1754944e-38, %v1665
      %v1667 = vsel %vm1664, %v1666, %v1662
      %v1668 = vmul.f32 1.0, %v1667
      %v1669 = vrcp.pop %v1441
      %v1670 = vmul.f32 %v1441, %v1669
      %v1671 = vsub.f32 1.0, %v1670
      %v1672 = vmul.f32 %v1669, %v1671
      %v1673 = vadd.f32 %v1669, %v1672
      %vm1674 = vweird.f32 %v1441
      %vm1675 = vweird.f32 %v1669
      %vm1676 = vmor %vm1674, %vm1675
      %v1677 = vsel %vm1676, %v1669, %v1673
      %v1678 = vand.u32 2147483647, %v1441
      %vm1679 = vcmp.eq.f32.partialorder %v1678, 8.507059e+37
      %v1680 = vand.u32 %v1441, 2147483648
      %v1681 = vor.u32 1.1754944e-38, %v1680
      %v1682 = vsel %vm1679, %v1681, %v1677
      %v1683 = vmul.f32 1.0, %v1682
      %v1684 = vrcp.pop %v1442
      %v1685 = vmul.f32 %v1442, %v1684
      %v1686 = vsub.f32 1.0, %v1685
      %v1687 = vmul.f32 %v1684, %v1686
      %v1688 = vadd.f32 %v1684, %v1687
      %vm1689 = vweird.f32 %v1442
      %vm1690 = vweird.f32 %v1684
      %vm1691 = vmor %vm1689, %vm1690
      %v1692 = vsel %vm1691, %v1684, %v1688
      %v1693 = vand.u32 2147483647, %v1442
      %vm1694 = vcmp.eq.f32.partialorder %v1693, 8.507059e+37
      %v1695 = vand.u32 %v1442, 2147483648
      %v1696 = vor.u32 1.1754944e-38, %v1695
      %v1697 = vsel %vm1694, %v1696, %v1692
      %v1698 = vmul.f32 1.0, %v1697
      %v1699 = vrcp.pop %v1443
      %v1700 = vmul.f32 %v1443, %v1699
      %v1701 = vsub.f32 1.0, %v1700
      %v1702 = vmul.f32 %v1699, %v1701
      %v1703 = vadd.f32 %v1699, %v1702
      %vm1704 = vweird.f32 %v1443
      %vm1705 = vweird.f32 %v1699
      %vm1706 = vmor %vm1704, %vm1705
      %v1707 = vsel %vm1706, %v1699, %v1703
      %v1708 = vand.u32 2147483647, %v1443
      %vm1709 = vcmp.eq.f32.partialorder %v1708, 8.507059e+37
      %v1710 = vand.u32 %v1443, 2147483648
      %v1711 = vor.u32 1.1754944e-38, %v1710
      %v1712 = vsel %vm1709, %v1711, %v1707
      %v1713 = vmul.f32 1.0, %v1712
      %v1714 = vrcp.pop %v1444
      %v1715 = vmul.f32 %v1444, %v1714
      %v1716 = vsub.f32 1.0, %v1715
      %v1717 = vmul.f32 %v1714, %v1716
      %v1718 = vadd.f32 %v1714, %v1717
      %vm1719 = vweird.f32 %v1444
      %vm1720 = vweird.f32 %v1714
      %vm1721 = vmor %vm1719, %vm1720
      %v1722 = vsel %vm1721, %v1714, %v1718
      %v1723 = vand.u32 2147483647, %v1444
      %vm1724 = vcmp.eq.f32.partialorder %v1723, 8.507059e+37
      %v1725 = vand.u32 %v1444, 2147483648
      %v1726 = vor.u32 1.1754944e-38, %v1725
      %v1727 = vsel %vm1724, %v1726, %v1722
      %v1728 = vmul.f32 1.0, %v1727
      %v1729 = vrcp.pop %v1445
      %v1730 = vmul.f32 %v1445, %v1729
      %v1731 = vsub.f32 1.0, %v1730
      %v1732 = vmul.f32 %v1729, %v1731
      %v1733 = vadd.f32 %v1729, %v1732
      %vm1734 = vweird.f32 %v1445
      %vm1735 = vweird.f32 %v1729
      %vm1736 = vmor %vm1734, %vm1735
      %v1737 = vsel %vm1736, %v1729, %v1733
      %v1738 = vand.u32 2147483647, %v1445
      %vm1739 = vcmp.eq.f32.partialorder %v1738, 8.507059e+37
      %v1740 = vand.u32 %v1445, 2147483648
      %v1741 = vor.u32 1.1754944e-38, %v1740
      %v1742 = vsel %vm1739, %v1741, %v1737
      %v1743 = vmul.f32 1.0, %v1742
      %v1744 = vrcp.pop %v1446
      %v1745 = vmul.f32 %v1446, %v1744
      %v1746 = vsub.f32 1.0, %v1745
      %v1747 = vmul.f32 %v1744, %v1746
      %v1748 = vadd.f32 %v1744, %v1747
      %vm1749 = vweird.f32 %v1446
      %vm1750 = vweird.f32 %v1744
      %vm1751 = vmor %vm1749, %vm1750
      %v1752 = vsel %vm1751, %v1744, %v1748
      %v1753 = vand.u32 2147483647, %v1446
      %vm1754 = vcmp.eq.f32.partialorder %v1753, 8.507059e+37
      %v1755 = vand.u32 %v1446, 2147483648
      %v1756 = vor.u32 1.1754944e-38, %v1755
      %v1757 = vsel %vm1754, %v1756, %v1752
      %v1758 = vmul.f32 1.0, %v1757
      %v1759 = vrcp.pop %v1447
      %v1760 = vmul.f32 %v1447, %v1759
      %v1761 = vsub.f32 1.0, %v1760
      %v1762 = vmul.f32 %v1759, %v1761
      %v1763 = vadd.f32 %v1759, %v1762
      %vm1764 = vweird.f32 %v1447
      %vm1765 = vweird.f32 %v1759
      %vm1766 = vmor %vm1764, %vm1765
      %v1767 = vsel %vm1766, %v1759, %v1763
      %v1768 = vand.u32 2147483647, %v1447
      %vm1769 = vcmp.eq.f32.partialorder %v1768, 8.507059e+37
      %v1770 = vand.u32 %v1447, 2147483648
      %v1771 = vor.u32 1.1754944e-38, %v1770
      %v1772 = vsel %vm1769, %v1771, %v1767
      %v1773 = vmul.f32 1.0, %v1772
      %v1774 = vrcp.pop %v1448
      %v1775 = vmul.f32 %v1448, %v1774
      %v1776 = vsub.f32 1.0, %v1775
      %v1777 = vmul.f32 %v1774, %v1776
      %v1778 = vadd.f32 %v1774, %v1777
      %vm1779 = vweird.f32 %v1448
      %vm1780 = vweird.f32 %v1774
      %vm1781 = vmor %vm1779, %vm1780
      %v1782 = vsel %vm1781, %v1774, %v1778
      %v1783 = vand.u32 2147483647, %v1448
      %vm1784 = vcmp.eq.f32.partialorder %v1783, 8.507059e+37
      %v1785 = vand.u32 %v1448, 2147483648
      %v1786 = vor.u32 1.1754944e-38, %v1785
      %v1787 = vsel %vm1784, %v1786, %v1782
      %v1788 = vmul.f32 1.0, %v1787
      %v1789 = vrcp.pop %v1449
      %v1790 = vmul.f32 %v1449, %v1789
      %v1791 = vsub.f32 1.0, %v1790
      %v1792 = vmul.f32 %v1789, %v1791
      %v1793 = vadd.f32 %v1789, %v1792
      %vm1794 = vweird.f32 %v1449
      %vm1795 = vweird.f32 %v1789
      %vm1796 = vmor %vm1794, %vm1795
      %v1797 = vsel %vm1796, %v1789, %v1793
      %v1798 = vand.u32 2147483647, %v1449
      %vm1799 = vcmp.eq.f32.partialorder %v1798, 8.507059e+37
      %v1800 = vand.u32 %v1449, 2147483648
      %v1801 = vor.u32 1.1754944e-38, %v1800
      %v1802 = vsel %vm1799, %v1801, %v1797
      %v1803 = vmul.f32 1.0, %v1802
      %v1804 = vrcp.pop %v1450
      %v1805 = vmul.f32 %v1450, %v1804
      %v1806 = vsub.f32 1.0, %v1805
      %v1807 = vmul.f32 %v1804, %v1806
      %v1808 = vadd.f32 %v1804, %v1807
      %vm1809 = vweird.f32 %v1450
      %vm1810 = vweird.f32 %v1804
      %vm1811 = vmor %vm1809, %vm1810
      %v1812 = vsel %vm1811, %v1804, %v1808
      %v1813 = vand.u32 2147483647, %v1450
      %vm1814 = vcmp.eq.f32.partialorder %v1813, 8.507059e+37
      %v1815 = vand.u32 %v1450, 2147483648
      %v1816 = vor.u32 1.1754944e-38, %v1815
      %v1817 = vsel %vm1814, %v1816, %v1812
      %v1818 = vmul.f32 1.0, %v1817
      %v1819 = vrcp.pop %v1451
      %v1820 = vmul.f32 %v1451, %v1819
      %v1821 = vsub.f32 1.0, %v1820
      %v1822 = vmul.f32 %v1819, %v1821
      %v1823 = vadd.f32 %v1819, %v1822
      %vm1824 = vweird.f32 %v1451
      %vm1825 = vweird.f32 %v1819
      %vm1826 = vmor %vm1824, %vm1825
      %v1827 = vsel %vm1826, %v1819, %v1823
      %v1828 = vand.u32 2147483647, %v1451
      %vm1829 = vcmp.eq.f32.partialorder %v1828, 8.507059e+37
      %v1830 = vand.u32 %v1451, 2147483648
      %v1831 = vor.u32 1.1754944e-38, %v1830
      %v1832 = vsel %vm1829, %v1831, %v1827
      %v1833 = vmul.f32 1.0, %v1832
      %v1834 = vrcp.pop %v1452
      %v1835 = vmul.f32 %v1452, %v1834
      %v1836 = vsub.f32 1.0, %v1835
      %v1837 = vmul.f32 %v1834, %v1836
      %v1838 = vadd.f32 %v1834, %v1837
      %vm1839 = vweird.f32 %v1452
      %vm1840 = vweird.f32 %v1834
      %vm1841 = vmor %vm1839, %vm1840
      %v1842 = vsel %vm1841, %v1834, %v1838
      %v1843 = vand.u32 2147483647, %v1452
      %vm1844 = vcmp.eq.f32.partialorder %v1843, 8.507059e+37
      %v1845 = vand.u32 %v1452, 2147483648
      %v1846 = vor.u32 1.1754944e-38, %v1845
      %v1847 = vsel %vm1844, %v1846, %v1842
      %v1848 = vmul.f32 1.0, %v1847
      %v1849 = vrcp.pop %v1453
      %v1850 = vmul.f32 %v1453, %v1849
      %v1851 = vsub.f32 1.0, %v1850
      %v1852 = vmul.f32 %v1849, %v1851
      %v1853 = vadd.f32 %v1849, %v1852
      %vm1854 = vweird.f32 %v1453
      %vm1855 = vweird.f32 %v1849
      %vm1856 = vmor %vm1854, %vm1855
      %v1857 = vsel %vm1856, %v1849, %v1853
      %v1858 = vand.u32 2147483647, %v1453
      %vm1859 = vcmp.eq.f32.partialorder %v1858, 8.507059e+37
      %v1860 = vand.u32 %v1453, 2147483648
      %v1861 = vor.u32 1.1754944e-38, %v1860
      %v1862 = vsel %vm1859, %v1861, %v1857
      %v1863 = vmul.f32 1.0, %v1862
      %v1864 = vrcp.pop %v1454
      %v1865 = vmul.f32 %v1454, %v1864
      %v1866 = vsub.f32 1.0, %v1865
      %v1867 = vmul.f32 %v1864, %v1866
      %v1868 = vadd.f32 %v1864, %v1867
      %vm1869 = vweird.f32 %v1454
      %vm1870 = vweird.f32 %v1864
      %vm1871 = vmor %vm1869, %vm1870
      %v1872 = vsel %vm1871, %v1864, %v1868
      %v1873 = vand.u32 2147483647, %v1454
      %vm1874 = vcmp.eq.f32.partialorder %v1873, 8.507059e+37
      %v1875 = vand.u32 %v1454, 2147483648
      %v1876 = vor.u32 1.1754944e-38, %v1875
      %v1877 = vsel %vm1874, %v1876, %v1872
      %v1878 = vmul.f32 1.0, %v1877
      %v1879 = vrcp.pop %v1455
      %v1880 = vmul.f32 %v1455, %v1879
      %v1881 = vsub.f32 1.0, %v1880
      %v1882 = vmul.f32 %v1879, %v1881
      %v1883 = vadd.f32 %v1879, %v1882
      %vm1884 = vweird.f32 %v1455
      %vm1885 = vweird.f32 %v1879
      %vm1886 = vmor %vm1884, %vm1885
      %v1887 = vsel %vm1886, %v1879, %v1883
      %v1888 = vand.u32 2147483647, %v1455
      %vm1889 = vcmp.eq.f32.partialorder %v1888, 8.507059e+37
      %v1890 = vand.u32 %v1455, 2147483648
      %v1891 = vor.u32 1.1754944e-38, %v1890
      %v1892 = vsel %vm1889, %v1891, %v1887
      %v1893 = vmul.f32 1.0, %v1892
      %v1894 = vrcp.pop %v1456
      %v1895 = vmul.f32 %v1456, %v1894
      %v1896 = vsub.f32 1.0, %v1895
      %v1897 = vmul.f32 %v1894, %v1896
      %v1898 = vadd.f32 %v1894, %v1897
      %vm1899 = vweird.f32 %v1456
      %vm1900 = vweird.f32 %v1894
      %vm1901 = vmor %vm1899, %vm1900
      %v1902 = vsel %vm1901, %v1894, %v1898
      %v1903 = vand.u32 2147483647, %v1456
      %vm1904 = vcmp.eq.f32.partialorder %v1903, 8.507059e+37
      %v1905 = vand.u32 %v1456, 2147483648
      %v1906 = vor.u32 1.1754944e-38, %v1905
      %v1907 = vsel %vm1904, %v1906, %v1902
      %v1908 = vmul.f32 1.0, %v1907
      %v1909 = vrcp.pop %v1457
      %v1910 = vmul.f32 %v1457, %v1909
      %v1911 = vsub.f32 1.0, %v1910
      %v1912 = vmul.f32 %v1909, %v1911
      %v1913 = vadd.f32 %v1909, %v1912
      %vm1914 = vweird.f32 %v1457
      %vm1915 = vweird.f32 %v1909
      %vm1916 = vmor %vm1914, %vm1915
      %v1917 = vsel %vm1916, %v1909, %v1913
      %v1918 = vand.u32 2147483647, %v1457
      %vm1919 = vcmp.eq.f32.partialorder %v1918, 8.507059e+37
      %v1920 = vand.u32 %v1457, 2147483648
      %v1921 = vor.u32 1.1754944e-38, %v1920
      %v1922 = vsel %vm1919, %v1921, %v1917
      %v1923 = vmul.f32 1.0, %v1922
      %v1924 = vrcp.pop %v1458
      %v1925 = vmul.f32 %v1458, %v1924
      %v1926 = vsub.f32 1.0, %v1925
      %v1927 = vmul.f32 %v1924, %v1926
      %v1928 = vadd.f32 %v1924, %v1927
      %vm1929 = vweird.f32 %v1458
      %vm1930 = vweird.f32 %v1924
      %vm1931 = vmor %vm1929, %vm1930
      %v1932 = vsel %vm1931, %v1924, %v1928
      %v1933 = vand.u32 2147483647, %v1458
      %vm1934 = vcmp.eq.f32.partialorder %v1933, 8.507059e+37
      %v1935 = vand.u32 %v1458, 2147483648
      %v1936 = vor.u32 1.1754944e-38, %v1935
      %v1937 = vsel %vm1934, %v1936, %v1932
      %v1938 = vmul.f32 1.0, %v1937
      %v1939 = vmul.f32 %v547, %v1473
      %v1940 = vmul.f32 %v549, %v1488
      %v1941 = vmul.f32 %v552, %v1503
      %v1942 = vmul.f32 %v554, %v1518
      %v1943 = vmul.f32 %v557, %v1533
      %v1944 = vmul.f32 %v559, %v1548
      %v1945 = vmul.f32 %v562, %v1563
      %v1946 = vmul.f32 %v564, %v1578
      %v1947 = vmul.f32 %v567, %v1593
      %v1948 = vmul.f32 %v569, %v1608
      %v1949 = vmul.f32 %v572, %v1623
      %v1950 = vmul.f32 %v574, %v1638
      %v1951 = vmul.f32 %v577, %v1653
      %v1952 = vmul.f32 %v579, %v1668
      %v1953 = vmul.f32 %v582, %v1683
      %v1954 = vmul.f32 %v584, %v1698
      %v1955 = vmul.f32 %v587, %v1713
      %v1956 = vmul.f32 %v589, %v1728
      %v1957 = vmul.f32 %v592, %v1743
      %v1958 = vmul.f32 %v594, %v1758
      %v1959 = vmul.f32 %v597, %v1773
      %v1960 = vmul.f32 %v599, %v1788
      %v1961 = vmul.f32 %v602, %v1803
      %v1962 = vmul.f32 %v604, %v1818
      %v1963 = vmul.f32 %v607, %v1833
      %v1964 = vmul.f32 %v609, %v1848
      %v1965 = vmul.f32 %v612, %v1863
      %v1966 = vmul.f32 %v614, %v1878
      %v1967 = vmul.f32 %v617, %v1893
      %v1968 = vmul.f32 %v619, %v1908
      %v1969 = vmul.f32 %v622, %v1923
      %v1970 = vmul.f32 %v624, %v1938
      %v1971 = vpack.c.bf16 %v1939, %v1939
      %v1972 = vpack.c.bf16 %v1940, %v1940
      %v1973 = vpack.c.bf16 %v1941, %v1941
      %v1974 = vpack.c.bf16 %v1942, %v1942
      %v1975 = vpack.c.bf16 %v1943, %v1943
      %v1976 = vpack.c.bf16 %v1944, %v1944
      %v1977 = vpack.c.bf16 %v1945, %v1945
      %v1978 = vpack.c.bf16 %v1946, %v1946
      %v1979 = vpack.c.bf16 %v1947, %v1947
      %v1980 = vpack.c.bf16 %v1948, %v1948
      %v1981 = vpack.c.bf16 %v1949, %v1949
      %v1982 = vpack.c.bf16 %v1950, %v1950
      %v1983 = vpack.c.bf16 %v1951, %v1951
      %v1984 = vpack.c.bf16 %v1952, %v1952
      %v1985 = vpack.c.bf16 %v1953, %v1953
      %v1986 = vpack.c.bf16 %v1954, %v1954
      %v1987 = vpack.c.bf16 %v1955, %v1955
      %v1988 = vpack.c.bf16 %v1956, %v1956
      %v1989 = vpack.c.bf16 %v1957, %v1957
      %v1990 = vpack.c.bf16 %v1958, %v1958
      %v1991 = vpack.c.bf16 %v1959, %v1959
      %v1992 = vpack.c.bf16 %v1960, %v1960
      %v1993 = vpack.c.bf16 %v1961, %v1961
      %v1994 = vpack.c.bf16 %v1962, %v1962
      %v1995 = vpack.c.bf16 %v1963, %v1963
      %v1996 = vpack.c.bf16 %v1964, %v1964
      %v1997 = vpack.c.bf16 %v1965, %v1965
      %v1998 = vpack.c.bf16 %v1966, %v1966
      %v1999 = vpack.c.bf16 %v1967, %v1967
      %v2000 = vpack.c.bf16 %v1968, %v1968
      %v2001 = vpack.c.bf16 %v1969, %v1969
      %v2002 = vpack.c.bf16 %v1970, %v1970
      %2003 = vst.msk [vmem:[%s267] sm:$0xf] %vm1298, %v1971
      %2004 = vst.msk [vmem:[%s267 + $0x4] sm:$0xf] %vm1298, %v1972
      %2005 = vst.msk [vmem:[%s267 + $0x8] sm:$0xf] %vm1298, %v1973
      %2006 = vst.msk [vmem:[%s267 + $0xc] sm:$0xf] %vm1298, %v1974
      %2007 = vst.msk [vmem:[%s267 + $0x10] sm:$0xf] %vm1298, %v1975
      %2008 = vst.msk [vmem:[%s267 + $0x14] sm:$0xf] %vm1298, %v1976
      %2009 = vst.msk [vmem:[%s267 + $0x18] sm:$0xf] %vm1298, %v1977
      %2010 = vst.msk [vmem:[%s267 + $0x1c] sm:$0xf] %vm1298, %v1978
      %2011 = vst.msk [vmem:[%s267 + $0x20] sm:$0xf] %vm1298, %v1979
      %2012 = vst.msk [vmem:[%s267 + $0x24] sm:$0xf] %vm1298, %v1980
      %2013 = vst.msk [vmem:[%s267 + $0x28] sm:$0xf] %vm1298, %v1981
      %2014 = vst.msk [vmem:[%s267 + $0x2c] sm:$0xf] %vm1298, %v1982
      %2015 = vst.msk [vmem:[%s267 + $0x30] sm:$0xf] %vm1298, %v1983
      %2016 = vst.msk [vmem:[%s267 + $0x34] sm:$0xf] %vm1298, %v1984
      %2017 = vst.msk [vmem:[%s267 + $0x38] sm:$0xf] %vm1298, %v1985
      %2018 = vst.msk [vmem:[%s267 + $0x3c] sm:$0xf] %vm1298, %v1986
      %2019 = vst.msk [vmem:[%s267 + $0x40] sm:$0xf] %vm1298, %v1987
      %2020 = vst.msk [vmem:[%s267 + $0x44] sm:$0xf] %vm1298, %v1988
      %2021 = vst.msk [vmem:[%s267 + $0x48] sm:$0xf] %vm1298, %v1989
      %2022 = vst.msk [vmem:[%s267 + $0x4c] sm:$0xf] %vm1298, %v1990
      %2023 = vst.msk [vmem:[%s267 + $0x50] sm:$0xf] %vm1298, %v1991
      %2024 = vst.msk [vmem:[%s267 + $0x54] sm:$0xf] %vm1298, %v1992
      %2025 = vst.msk [vmem:[%s267 + $0x58] sm:$0xf] %vm1298, %v1993
      %2026 = vst.msk [vmem:[%s267 + $0x5c] sm:$0xf] %vm1298, %v1994
      %2027 = vst.msk [vmem:[%s267 + $0x60] sm:$0xf] %vm1298, %v1995
      %2028 = vst.msk [vmem:[%s267 + $0x64] sm:$0xf] %vm1298, %v1996
      %2029 = vst.msk [vmem:[%s267 + $0x68] sm:$0xf] %vm1298, %v1997
      %2030 = vst.msk [vmem:[%s267 + $0x6c] sm:$0xf] %vm1298, %v1998
      %2031 = vst.msk [vmem:[%s267 + $0x70] sm:$0xf] %vm1298, %v1999
      %2032 = vst.msk [vmem:[%s267 + $0x74] sm:$0xf] %vm1298, %v2000
      %2033 = vst.msk [vmem:[%s267 + $0x78] sm:$0xf] %vm1298, %v2001
      %2034 = vst.msk [vmem:[%s267 + $0x7c] sm:$0xf] %vm1298, %v2002
      %s2035 = smul.u32 32, %s18
      %p2036 = scmp.lt.s32.totalorder %s2035, 63
      %s2037 = scalar_select %p2036, %s2035, 63
      %s2038 = smul.addr %s2037, 4
      %s2039 = scalar_lea.vmem %s5, %s2038
      %s2040 = smul.u32 32, %s18
      %p2041 = scmp.lt.s32.totalorder %s2040, 63
      %s2042 = scalar_select %p2041, %s2040, 63
      %s2043 = smul.addr %s2042, 4
      %s2044 = scalar_lea.vmem %s6, %s2043
      // Predicated region
      $region41: #{tpu_custom_call.1} parent=39 // pred_check
        %p2045 = pneg %p146
      $region42: #{tpu_custom_call.1} parent=39 // pred_check_branch
        %2047 = sbr.rel (%p2045) target = $region44
      $region43: #{tpu_custom_call.1} parent=39 // pred_region
        %s2048 = smul.u32 32, %s18
      $region44: #{tpu_custom_call.1} parent=39 // pred_fallthru
        _
      // Predicated region
      $region45: #{tpu_custom_call.1} parent=39 // pred_check
        %p2049 = pneg %p172
      $region46: #{tpu_custom_call.1} parent=39 // pred_check_branch
        %2051 = sbr.rel (%p2049) target = $region48
      $region47: #{tpu_custom_call.1} parent=39 // pred_region
        %s2052 = smul.u32 32, %s18
      $region48: #{tpu_custom_call.1} parent=39 // pred_fallthru
        _
    $region40: #{tpu_custom_call.1} parent=5 // pred_fallthru
      _
    %p2053 = scmp.le.s32.totalorder 2, %s13
    // Predicated region
    $region49: #{tpu_custom_call.1} parent=5 // pred_check
      %p2054 = pneg %p2053
    $region50: #{tpu_custom_call.1} parent=5 // pred_check_branch
      %2056 = sbr.rel (%p2054) target = $region52
    $region51: #{tpu_custom_call.1} parent=5 // pred_region
      %s2057 = ssub.s32 %s13, 2
      // Predicated region
      $region53: #{tpu_custom_call.1} parent=51 // pred_check
        %p2058 = pneg %p152
      $region54: #{tpu_custom_call.1} parent=51 // pred_check_branch
        %2060 = sbr.rel (%p2058) target = $region56
      $region55: #{tpu_custom_call.1} parent=51 // pred_region
        %s2061 = smul.u32 32, %s19
        %p2062 = scmp.lt.s32.totalorder %s2061, 63
        %s2063 = scalar_select %p2062, %s2061, 63
        %s2064 = smul.addr %s2063, 4
        %s2065 = scalar_lea.vmem %s5, %s2064
      $region56: #{tpu_custom_call.1} parent=51 // pred_fallthru
        _
      // Predicated region
      $region57: #{tpu_custom_call.1} parent=51 // pred_check
        %p2066 = pneg %p178
      $region58: #{tpu_custom_call.1} parent=51 // pred_check_branch
        %2068 = sbr.rel (%p2066) target = $region60
      $region59: #{tpu_custom_call.1} parent=51 // pred_region
        %s2069 = smul.u32 32, %s19
        %p2070 = scmp.lt.s32.totalorder %s2069, 63
        %s2071 = scalar_select %p2070, %s2069, 63
        %s2072 = smul.addr %s2071, 4
        %s2073 = scalar_lea.vmem %s6, %s2072
      $region60: #{tpu_custom_call.1} parent=51 // pred_fallthru
        _
    $region52: #{tpu_custom_call.1} parent=5 // pred_fallthru
      _
  $region6: #{tpu_custom_call.1} parent=0 // loop_footer
    %s17 = sadd.s32 1, %s13
  $region7: #{tpu_custom_call.1} parent=0 // loop_footer_branch
    %12 = sbr.rel target = $region3
  $region8: #{tpu_custom_call.1} parent=0 // loop_exit
    _

</llo_original>
